<compile_context>
chip_gen: v7x
topology: tpu7x:2x2x1
jax: 0.10.0
libtpu: 0.0.40
codegen_flags: <defaults>
</compile_context>

<pallas_src>
import jax
import jax.numpy as jnp
import numpy as np
from jax.experimental import pallas as pl
from jax.experimental.pallas import tpu as pltpu

MIB = 1024 * 1024
_PRECISION = jax.lax.Precision.HIGHEST


def _update_memory_matrix_kernel(pt_ref, upd_mat_ref, mem_mat_ref,
                                 decay_tiled_ref, out_mat_ref):
    """Matrix-path memory update for a block of Bt batch elements.

    pt_ref          : (Bt, M, H)   softmax(logits) transposed, f32
    upd_mat_ref     : (Bt, H, D*D) head-space update matrices (flattened)
    mem_mat_ref     : (Bt, M, D*D) current memory matrices (flattened)
    decay_tiled_ref : (M, D*D)     sigmoid(decay_strength) lane-tiled (constant)
    out_mat_ref     : (Bt, M, D*D) updated memories (HBM-aliased with mem_mat)
    """
    pt = pt_ref[...].astype(jnp.float32)                        # (Bt, M, H)
    strength = jnp.mean(pt, axis=-1, keepdims=True)             # (Bt, M, 1)

    # Project the head-space update into memory space on the MXU; write the
    # result straight into the output block (no full-size compiler temporary).
    out_mat_ref[...] = jnp.einsum(
        'bmh,bhk->bmk', pt, upd_mat_ref[...],
        preferred_element_type=jnp.float32,
        precision=_PRECISION).astype(out_mat_ref.dtype)

    # Decay blend accumulated in place; the elementwise chain streams
    # vreg-by-vreg (no materialized (Bt, M, D*D) temporary).
    decay_tiled = strength * decay_tiled_ref[...]                # (Bt, M, D*D)
    blended = mem_mat_ref[...].astype(jnp.float32) * (1.0 - decay_tiled)
    out_mat_ref[...] = (out_mat_ref[...].astype(jnp.float32)
                        + blended).astype(out_mat_ref.dtype)


def _vmem_capacity_bytes():
    try:
        cap = int(pltpu.get_tpu_info().vmem_capacity_bytes)
    except Exception:
        cap = 64 * MIB            # conservative (v7x-sized) fallback
    return max(cap, 32 * MIB)


def _pick_batch_tile(batch, h, m, k, mat_itemsize, budget_bytes):
    """Largest batch block that fits the VMEM budget while keeping >=2 grid
    steps (v7x has 2 TensorCores) and ideally >=4 (DMA/compute overlap)."""
    # Streamed blocks per batch element, per pipeline stage:
    #   pt (M*H f32) + upd_mat (H*K) + mem_mat (M*K) inputs, out_mat (M*K) output
    per_b = m * h * 4 + (h * k + 2 * m * k) * mat_itemsize
    # Constant-index decay block is still double-buffered by the pipeline.
    const = 2 * m * k * 4
    margin = 2 * MIB              # Mosaic internal scratch / small temporaries
    avail = max(budget_bytes - const - margin, per_b)
    bt = max(1, avail // (2 * per_b))                 # 2x: double-buffered streams
    min_steps = 4 if batch >= 4 else (2 if batch >= 2 else 1)
    bt = min(bt, max(1, batch // min_steps))
    return int(max(1, min(bt, batch)))


def update_memories(connection_logits, update, memories, decay_strength,
                    *, matrix_dtype=None):
    """JAX/Pallas equivalent of UpdateMemories.forward.

    connection_logits: (B, H, M)
    update:   (matrix (B, H, D, D), normalizer (B, H, D))
    memories: (matrix (B, M, D, D), normalizer (B, M, D))
    decay_strength: (M, D)
    matrix_dtype: optional storage dtype (e.g. jnp.bfloat16) for the matrix
        stream; ~2x HBM-byte reduction but breaks 1e-5 exactness (opt-in).
    returns updated (matrix (B, M, D, D), normalizer (B, M, D))

    Note: the memory matrix buffer is aliased to the output (in-place update);
    do not reuse the passed-in memory matrix afterwards.
    """
    upd_mat, upd_norm = update
    mem_mat, mem_norm = memories
    B, H, M = connection_logits.shape
    D = upd_norm.shape[-1]
    K = D * D
    f32 = jnp.float32

    # ---- shared prep (computed once, in XLA) --------------------------------
    p = jax.nn.softmax(connection_logits.astype(f32), axis=-1)   # (B, H, M)
    pt = jnp.swapaxes(p, -1, -2)                                 # (B, M, H)
    strength = jnp.mean(pt, axis=-1)                             # (B, M)
    native_decay = jax.nn.sigmoid(decay_strength.astype(f32))    # (M, D)
    decay = strength[..., None] * native_decay                   # (B, M, D)

    # ---- normalizer path: left in plain XLA on purpose ----------------------
    # It carries only ~1/D of the HBM bytes and its last dim (D) is not
    # lane-dense; keeping it out of the kernel avoids masked vst on that path.
    upd_norm_m = jnp.matmul(pt, upd_norm.astype(f32), precision=_PRECISION)
    out_norm = (mem_norm.astype(f32) * (1.0 - decay) + upd_norm_m).astype(mem_norm.dtype)

    # ---- matrix path (the dominant HBM stream): Pallas kernel ---------------
    upd_mat_f = upd_mat.reshape(B, H, K)
    mem_mat_f = mem_mat.reshape(B, M, K)
    if matrix_dtype is not None:
        upd_mat_f = upd_mat_f.astype(matrix_dtype)
        mem_mat_f = mem_mat_f.astype(matrix_dtype)
    out_dtype = mem_mat_f.dtype
    mat_itemsize = jnp.dtype(out_dtype).itemsize

    # Hoisted constant: lane-tiled sigmoid(decay_strength); flat column k decays
    # with native_decay[:, k % D] (matches torch `.repeat`).
    # TODO(synk): when D % 128 == 0 keep 4-D (Bt, M, D, D) blocks and broadcast
    # plain (M, D) decay along the sublane axis instead of this tiled constant.
    native_decay_tiled = jnp.tile(native_decay, (1, D))          # (M, K)

    # Generation-aware sizing: ~half of VMEM as block budget on 128 MiB parts
    # (v5e/v6e), ~24 MiB on 64 MiB parts (v7x); scoped-VMEM limit at 3/4.
    vmem_cap = _vmem_capacity_bytes()
    budget = max(min(vmem_cap // 2, vmem_cap - 40 * MIB), 8 * MIB)
    vmem_limit = vmem_cap * 3 // 4

    Bt = _pick_batch_tile(B, H, M, K, mat_itemsize, budget)
    grid = (pl.cdiv(B, Bt),)    # partial tail block handled by Pallas masking

    out_mat_f = pl.pallas_call(
        _update_memory_matrix_kernel,
        out_shape=jax.ShapeDtypeStruct((B, M, K), out_dtype),
        grid_spec=pltpu.PrefetchScalarGridSpec(
            num_scalar_prefetch=0,
            grid=grid,
            in_specs=[
                pl.BlockSpec((Bt, M, H), lambda b: (b, 0, 0)),
                pl.BlockSpec((Bt, H, K), lambda b: (b, 0, 0)),
                # TODO(synk): on v6e (VMEM headroom) try pipeline_mode=pl.Buffered(3)
                # on the mem/out matrix specs and re-sweep Bt.
                pl.BlockSpec((Bt, M, K), lambda b: (b, 0, 0)),
                # constant-index block: DMA'd once, stays VMEM-resident
                pl.BlockSpec((M, K), lambda b: (0, 0)),
            ],
            out_specs=pl.BlockSpec((Bt, M, K), lambda b: (b, 0, 0)),
        ),
        # in-place memory-matrix update: mem_mat_f (input 2) -> output 0
        input_output_aliases={2: 0},
        compiler_params=pltpu.CompilerParams(
            dimension_semantics=("parallel",),
            vmem_limit_bytes=int(vmem_limit),
        ),
    )(pt, upd_mat_f, mem_mat_f, native_decay_tiled)

    return out_mat_f.reshape(B, M, D, D), out_norm


def update_memories_ref(connection_logits, update, memories, decay_strength):
    """Pure-JAX reference mirroring the PyTorch forward."""
    upd_mat, upd_norm = update
    mem_mat, mem_norm = memories
    B, H, M = connection_logits.shape
    D = upd_norm.shape[-1]
    upd_mat_f = upd_mat.reshape(B, H, D * D)
    mem_mat_f = mem_mat.reshape(B, M, D * D)

    p = jax.nn.softmax(connection_logits, axis=-1)       # (B, H, M)
    pt = jnp.swapaxes(p, -1, -2)                         # (B, M, H)
    strength = jnp.mean(pt, axis=-1)                     # (B, M)
    native_decay = jax.nn.sigmoid(decay_strength)        # (M, D)
    decay = strength[..., None] * native_decay           # (B, M, D)

    upd_mat_m = jnp.matmul(pt, upd_mat_f, precision=_PRECISION)   # (B, M, D*D)
    upd_norm_m = jnp.matmul(pt, upd_norm, precision=_PRECISION)   # (B, M, D)

    decay_tiled = jnp.tile(decay, (1, 1, D))             # (B, M, D*D)
    out_mat_f = mem_mat_f * (1.0 - decay_tiled) + upd_mat_m
    out_norm = mem_norm * (1.0 - decay) + upd_norm_m
    return out_mat_f.reshape(B, M, D, D), out_norm


if __name__ == "__main__":
    B, H, M, D = 2, 8, 8, 32  # batch, num_heads, num_memories, d_head

    key = jax.random.PRNGKey(0)
    k1, k2, k3, k4, k5, k6 = jax.random.split(key, 6)

    # Deterministic parameter init matching the module's __init__:
    #   decay_factors ~ U(0.001, 0.2); decay_logits = -log(1/decay_factors - 1)
    decay_factors = jax.random.uniform(k1, (M, D), minval=0.001, maxval=0.2)
    decay_strength = -jnp.log(1.0 / decay_factors - 1.0)

    connection_logits = jax.random.normal(k2, (B, H, M), dtype=jnp.float32)
    upd_mat = jax.random.normal(k3, (B, H, D, D), dtype=jnp.float32)
    upd_norm = jax.random.normal(k4, (B, H, D), dtype=jnp.float32)
    mem_mat = jax.random.normal(k5, (B, M, D, D), dtype=jnp.float32)
    mem_norm = jax.random.normal(k6, (B, M, D), dtype=jnp.float32)

    # Compute the reference first: the kernel aliases/donates the memory matrix.
    ref_mat, ref_norm = update_memories_ref(
        connection_logits, (upd_mat, upd_norm), (mem_mat, mem_norm), decay_strength)
    jax.block_until_ready((ref_mat, ref_norm))

    out_mat, out_norm = update_memories(
        connection_logits, (upd_mat, upd_norm), (mem_mat, mem_norm), decay_strength)
    jax.block_until_ready((out_mat, out_norm))

    np.testing.assert_allclose(np.asarray(out_mat), np.asarray(ref_mat), rtol=1e-5, atol=1e-5)
    np.testing.assert_allclose(np.asarray(out_norm), np.asarray(ref_norm), rtol=1e-5, atol=1e-5)

    print("KERNEL_OK")
</pallas_src>

<mosaic_0001>
module attributes {stable_mosaic.version = 11 : i64} {
  func.func @_update_memory_matrix_kernel(%arg0: i32, %arg1: memref<1x8x8xf32, #tpu.memory_space<vmem>>, %arg2: memref<1x8x1024xf32, #tpu.memory_space<vmem>>, %arg3: memref<1x8x1024xf32, #tpu.memory_space<vmem>>, %arg4: memref<8x1024xf32, #tpu.memory_space<vmem>>, %arg5: memref<1x8x1024xf32, #tpu.memory_space<vmem>>) attributes {dimension_semantics = [#tpu.dimension_semantics<parallel>], iteration_bounds = array<i64: 2>, scalar_prefetch = 0 : i64, scratch_operands = 0 : i64, tpu.core_type = #tpu.core_type<tc>, window_params = [{transform_indices = @transform_0, window_bounds = array<i64: 1, 8, 8>}, {transform_indices = @transform_1, window_bounds = array<i64: 1, 8, 1024>}, {transform_indices = @transform_2, window_bounds = array<i64: 1, 8, 1024>}, {pipeline_mode = #tpu.pipeline_mode<synchronous>, transform_indices = @transform_3, window_bounds = array<i64: 8, 1024>}, {transform_indices = @transform_4, window_bounds = array<i64: 1, 8, 1024>}]} {
    %c0 = arith.constant 0 : index
    %c0_0 = arith.constant 0 : index
    %c0_1 = arith.constant 0 : index
    %0 = vector.load %arg1[%c0, %c0_0, %c0_1] : memref<1x8x8xf32, #tpu.memory_space<vmem>>, vector<1x8x8xf32>
    %cst = arith.constant dense<0.000000e+00> : vector<1x8xf32>
    %1 = vector.multi_reduction <add>, %0, %cst [2] : vector<1x8x8xf32> to vector<1x8xf32>
    %2 = vector.shape_cast %1 : vector<1x8xf32> to vector<1x8x1xf32>
    %cst_2 = arith.constant 8.000000e+00 : f32
    %3 = vector.broadcast %cst_2 : f32 to vector<1x8x1xf32>
    %4 = arith.divf %2, %3 : vector<1x8x1xf32>
    %c0_3 = arith.constant 0 : index
    %c0_4 = arith.constant 0 : index
    %c0_5 = arith.constant 0 : index
    %5 = vector.load %arg2[%c0_3, %c0_4, %c0_5] : memref<1x8x1024xf32, #tpu.memory_space<vmem>>, vector<1x8x1024xf32>
    "tpu.trace_start"() <{level = 10 : i32, message = "bmh,bhk->bmk"}> : () -> ()
    %cst_6 = arith.constant dense<0.000000e+00> : vector<1x8x1024xf32>
    %6 = tpu.matmul %0, %5, %cst_6 {dimension_numbers = #tpu.dot_dimension_numbers<[2], [1], [1], [2], [0, 0, 0, 1, 1, 2], [0], [0]>, precision = #tpu.contract_precision<fp32>} : vector<1x8x8xf32>, vector<1x8x1024xf32>, vector<1x8x1024xf32> -> vector<1x8x1024xf32>
    "tpu.trace_stop"() : () -> ()
    %c0_7 = arith.constant 0 : index
    %c0_8 = arith.constant 0 : index
    %c0_9 = arith.constant 0 : index
    %7 = vector.load %arg5[%c0_7, %c0_8, %c0_9] : memref<1x8x1024xf32, #tpu.memory_space<vmem>>, vector<1x8x1024xf32>
    tpu.vector_store %arg5[%c0_7, %c0_8, %c0_9], %6 {strides = array<i32>} : memref<1x8x1024xf32, #tpu.memory_space<vmem>>, vector<1x8x1024xf32>,
    %c0_10 = arith.constant 0 : index
    %c0_11 = arith.constant 0 : index
    %8 = vector.load %arg4[%c0_10, %c0_11] : memref<8x1024xf32, #tpu.memory_space<vmem>>, vector<8x1024xf32>
    %9 = vector.shape_cast %8 : vector<8x1024xf32> to vector<1x8x1024xf32>
    %10 = vector.broadcast %4 : vector<1x8x1xf32> to vector<1x8x1024xf32>
    %11 = arith.mulf %10, %9 : vector<1x8x1024xf32>
    %c0_12 = arith.constant 0 : index
    %c0_13 = arith.constant 0 : index
    %c0_14 = arith.constant 0 : index
    %12 = vector.load %arg3[%c0_12, %c0_13, %c0_14] : memref<1x8x1024xf32, #tpu.memory_space<vmem>>, vector<1x8x1024xf32>
    %cst_15 = arith.constant 1.000000e+00 : f32
    %13 = vector.broadcast %cst_15 : f32 to vector<1x8x1024xf32>
    %14 = arith.subf %13, %11 : vector<1x8x1024xf32>
    %15 = arith.mulf %12, %14 : vector<1x8x1024xf32>
    %c0_16 = arith.constant 0 : index
    %c0_17 = arith.constant 0 : index
    %c0_18 = arith.constant 0 : index
    %16 = vector.load %arg5[%c0_16, %c0_17, %c0_18] : memref<1x8x1024xf32, #tpu.memory_space<vmem>>, vector<1x8x1024xf32>
    %17 = arith.addf %16, %15 : vector<1x8x1024xf32>
    %c0_19 = arith.constant 0 : index
    %c0_20 = arith.constant 0 : index
    %c0_21 = arith.constant 0 : index
    %18 = vector.load %arg5[%c0_19, %c0_20, %c0_21] : memref<1x8x1024xf32, #tpu.memory_space<vmem>>, vector<1x8x1024xf32>
    tpu.vector_store %arg5[%c0_19, %c0_20, %c0_21], %17 {strides = array<i32>} : memref<1x8x1024xf32, #tpu.memory_space<vmem>>, vector<1x8x1024xf32>,
    return
  }
  func.func @transform_0(%arg0: i32) -> (i32, i32, i32) {
    %c0_i32 = arith.constant 0 : i32
    %c0_i32_0 = arith.constant 0 : i32
    %c0_i32_1 = arith.constant 0 : i32
    return %arg0, %c0_i32, %c0_i32_0 : i32, i32, i32
  }
  func.func @transform_1(%arg0: i32) -> (i32, i32, i32) {
    %c0_i32 = arith.constant 0 : i32
    %c0_i32_0 = arith.constant 0 : i32
    %c0_i32_1 = arith.constant 0 : i32
    return %arg0, %c0_i32, %c0_i32_0 : i32, i32, i32
  }
  func.func @transform_2(%arg0: i32) -> (i32, i32, i32) {
    %c0_i32 = arith.constant 0 : i32
    %c0_i32_0 = arith.constant 0 : i32
    %c0_i32_1 = arith.constant 0 : i32
    return %arg0, %c0_i32, %c0_i32_0 : i32, i32, i32
  }
  func.func @transform_3(%arg0: i32) -> (i32, i32) {
    %c0_i32 = arith.constant 0 : i32
    %c0_i32_0 = arith.constant 0 : i32
    %c0_i32_1 = arith.constant 0 : i32
    return %c0_i32, %c0_i32_0 : i32, i32
  }
  func.func @transform_4(%arg0: i32) -> (i32, i32, i32) {
    %c0_i32 = arith.constant 0 : i32
    %c0_i32_0 = arith.constant 0 : i32
    %c0_i32_1 = arith.constant 0 : i32
    return %arg0, %c0_i32, %c0_i32_0 : i32, i32, i32
  }
}

</mosaic_0001>

<llo_original>
// kernel: tpu_custom_call.1
$region0: #{tpu_custom_call.1}
  #allocation0 [shape = 'u32[]', space=smem, size = 0x4, offset = 0x4, fixed_abs, tag = 'smem constant byte address 0x4 - core index']
  #allocation1 [shape = 'u32[144,128]{1,0:T(1,128)}', space=vmem, size = 0x12000, scoped, tag = 'internal scratch']
  %s0 = inlined_call_operand.vmem [shape: f32[2,8,8], index: 0, kind: input, shape index: {}]
  %s1 = inlined_call_operand.vmem [shape: f32[2,8,1024], index: 1, kind: input, shape index: {}]
  %s2 = inlined_call_operand.hbm [shape: f32[2,8,1024], index: 2, kind: input, shape index: {}, may-alias: {2,4}]
  %s3 = inlined_call_operand.vmem [shape: f32[8,1024], index: 3, kind: input, shape index: {}]
  %s4 = inlined_call_operand.hbm [shape: f32[2,8,1024], index: 4, kind: output, shape index: {}, may-alias: {2,4}]
  %s5 = sld [smem:[#allocation0]]
  $region53: #{tpu_custom_call.1} parent=0
    _
  %s7 = ssub.s32 1, %s5
  %s8 = scalar_select 0, %s7, %s5
  $region1: #{tpu_custom_call.1} parent=0
    #allocation2 [shape = 'u8[65536]{0}', space=vmem, size = 0x10000, scoped, tag = 'input window, operand 2']
    #allocation3 [shape = 's32[2]{0}', space=sflag, size = 0x8, scoped, tag = 'scoped memory for tpu_custom_call.1']
    #allocation4 [shape = 's32[2]{0}', space=sflag, size = 0x8, scoped, tag = 'scoped memory for tpu_custom_call.1']
    #allocation5 [shape = 'u8[65536]{0}', space=vmem, size = 0x10000, scoped, tag = 'output window, operand 0']
    %9 = vsyncpa [#allocation3], 0
    %s10 = scalar_lea.sflag [#allocation3], 1
    %11 = vsyncpa %s10, 0
    %12 = vsyncpa [#allocation4], 0
    %s13 = scalar_lea.sflag [#allocation4], 1
    %14 = vsyncpa %s13, 0
    loop: start=0, step=1, limit=4
    $region2: #{tpu_custom_call.1} parent=1 // loop_pre_header
      _
    $region3: #{tpu_custom_call.1} parent=1 // loop_header
      %s16 = sphi 0, %s20
      %p17 = scmp.ge.s32.totalorder %s16, 4
      %s26 = sphi 0, %s28
      %s29 = sphi 0, %s26
      %s30 = sphi 0, %s29
      %s46 = sphi 0, %s30
      %s52 = sphi 0, %s54
      %s55 = sphi 0, %s52
      %s56 = sphi 0, %s55
      %s72 = sphi 0, %s56
      %s78 = sphi 0, %s80
      %s81 = sphi 0, %s78
      %s82 = sphi 0, %s81
      %s98 = sphi 0, %s82
      %s102 = sphi 0, %s102
      %s104 = sphi 0, %s102
      %s105 = sphi 0, %s104
      %s119 = sphi 0, %s105
      %s125 = sphi 0, %s127
      %s128 = sphi 0, %s125
      %s129 = sphi 0, %s128
      %s145 = sphi 0, %s129
    $region4: #{tpu_custom_call.1} parent=1 // loop_header_branch
      %19 = sbr.rel (%p17) target = $region8
    $region5: #{tpu_custom_call.1} parent=1 // loop_body
      %s21 = ssub.s32 %s16, 1
      %s22 = ssub.s32 %s16, 2
      %s23 = sadd.s32 %s16, 1
      %s24 = ssub.s32 %s16, %s23
      %p25 = scmp.eq.s32.totalorder %s24, 0
      %s27 = sadd.s32 %s26, 1
      %s28 = scalar_select %p25, %s26, %s27
      %p31 = pneg %p25
      %p32 = scmp.eq.s32.totalorder %s16, 1
      %p33 = por %p31, %p32
      %p34 = scmp.ne.s32.totalorder %s26, %s29
      %p35 = scmp.eq.s32.totalorder %s16, 0
      %p36 = por %p34, %p35
      %p37 = scmp.ne.s32.totalorder %s26, %s29
      %p38 = scmp.eq.s32.totalorder %s21, 1
      %p39 = por %p37, %p38
      %p40 = scmp.ne.s32.totalorder %s29, %s30
      %p41 = scmp.eq.s32.totalorder %s21, 0
      %p42 = por %p40, %p41
      %p43 = scmp.ne.s32.totalorder %s29, %s30
      %p44 = scmp.eq.s32.totalorder %s22, 1
      %p45 = por %p43, %p44
      %p47 = scmp.ne.s32.totalorder %s30, %s46
      %p48 = scmp.eq.s32.totalorder %s22, 0
      %p49 = por %p47, %p48
      %s50 = ssub.s32 %s16, %s23
      %p51 = scmp.eq.s32.totalorder %s50, 0
      %s53 = sadd.s32 %s52, 1
      %s54 = scalar_select %p51, %s52, %s53
      %p57 = pneg %p51
      %p58 = scmp.eq.s32.totalorder %s16, 1
      %p59 = por %p57, %p58
      %p60 = scmp.ne.s32.totalorder %s52, %s55
      %p61 = scmp.eq.s32.totalorder %s16, 0
      %p62 = por %p60, %p61
      %p63 = scmp.ne.s32.totalorder %s52, %s55
      %p64 = scmp.eq.s32.totalorder %s21, 1
      %p65 = por %p63, %p64
      %p66 = scmp.ne.s32.totalorder %s55, %s56
      %p67 = scmp.eq.s32.totalorder %s21, 0
      %p68 = por %p66, %p67
      %p69 = scmp.ne.s32.totalorder %s55, %s56
      %p70 = scmp.eq.s32.totalorder %s22, 1
      %p71 = por %p69, %p70
      %p73 = scmp.ne.s32.totalorder %s56, %s72
      %p74 = scmp.eq.s32.totalorder %s22, 0
      %p75 = por %p73, %p74
      %s76 = ssub.s32 %s16, %s23
      %p77 = scmp.eq.s32.totalorder %s76, 0
      %s79 = sadd.s32 %s78, 1
      %s80 = scalar_select %p77, %s78, %s79
      %p83 = pneg %p77
      %p84 = scmp.eq.s32.totalorder %s16, 1
      %p85 = por %p83, %p84
      %p86 = scmp.ne.s32.totalorder %s78, %s81
      %p87 = scmp.eq.s32.totalorder %s16, 0
      %p88 = por %p86, %p87
      %p89 = scmp.ne.s32.totalorder %s78, %s81
      %p90 = scmp.eq.s32.totalorder %s21, 1
      %p91 = por %p89, %p90
      %p92 = scmp.ne.s32.totalorder %s81, %s82
      %p93 = scmp.eq.s32.totalorder %s21, 0
      %p94 = por %p92, %p93
      %p95 = scmp.ne.s32.totalorder %s81, %s82
      %p96 = scmp.eq.s32.totalorder %s22, 1
      %p97 = por %p95, %p96
      %p99 = scmp.ne.s32.totalorder %s82, %s98
      %p100 = scmp.eq.s32.totalorder %s22, 0
      %p101 = por %p99, %p100
      %s103 = sadd.s32 %s102, 1
      %p106 = scmp.eq.s32.totalorder %s16, 1
      %p107 = scmp.ne.s32.totalorder %s102, %s104
      %p108 = scmp.eq.s32.totalorder %s16, 0
      %p109 = por %p107, %p108
      %p110 = scmp.ne.s32.totalorder %s102, %s104
      %p111 = scmp.eq.s32.totalorder %s21, 1
      %p112 = por %p110, %p111
      %p113 = scmp.ne.s32.totalorder %s104, %s105
      %p114 = scmp.eq.s32.totalorder %s21, 0
      %p115 = por %p113, %p114
      %p116 = scmp.ne.s32.totalorder %s104, %s105
      %p117 = scmp.eq.s32.totalorder %s22, 1
      %p118 = por %p116, %p117
      %p120 = scmp.ne.s32.totalorder %s105, %s119
      %p121 = scmp.eq.s32.totalorder %s22, 0
      %p122 = por %p120, %p121
      %s123 = ssub.s32 %s16, %s23
      %p124 = scmp.eq.s32.totalorder %s123, 0
      %s126 = sadd.s32 %s125, 1
      %s127 = scalar_select %p124, %s125, %s126
      %p130 = pneg %p124
      %p131 = scmp.eq.s32.totalorder %s16, 1
      %p132 = por %p130, %p131
      %p133 = scmp.ne.s32.totalorder %s125, %s128
      %p134 = scmp.eq.s32.totalorder %s16, 0
      %p135 = por %p133, %p134
      %p136 = scmp.ne.s32.totalorder %s125, %s128
      %p137 = scmp.eq.s32.totalorder %s21, 1
      %p138 = por %p136, %p137
      %p139 = scmp.ne.s32.totalorder %s128, %s129
      %p140 = scmp.eq.s32.totalorder %s21, 0
      %p141 = por %p139, %p140
      %p142 = scmp.ne.s32.totalorder %s128, %s129
      %p143 = scmp.eq.s32.totalorder %s22, 1
      %p144 = por %p142, %p143
      %p146 = scmp.ne.s32.totalorder %s129, %s145
      %p147 = scmp.eq.s32.totalorder %s22, 0
      %p148 = por %p146, %p147
      %p149 = scmp.le.s32.totalorder 1, %s16
      %p150 = scmp.lt.s32.totalorder %s16, 3
      %p151 = pnand %p149, %p150
      %p152 = pneg %p151
      // Predicated region
      $region9: #{tpu_custom_call.1} parent=5 // pred_check
        _
      $region10: #{tpu_custom_call.1} parent=5 // pred_check_branch
        %154 = sbr.rel (%p151) target = $region12
      $region11: #{tpu_custom_call.1} parent=5 // pred_region
        %s155 = ssub.s32 %s16, 1
        // Predicated region
        $region13: #{tpu_custom_call.1} parent=11 // pred_check
          %p156 = pneg %p115
        $region14: #{tpu_custom_call.1} parent=11 // pred_check_branch
          %158 = sbr.rel (%p156) target = $region16
        $region15: #{tpu_custom_call.1} parent=11 // pred_region
          _
        $region16: #{tpu_custom_call.1} parent=11 // pred_fallthru
          _
      $region12: #{tpu_custom_call.1} parent=5 // pred_fallthru
        _
      %p159 = scmp.lt.s32.totalorder %s16, 2
      // Predicated region
      $region17: #{tpu_custom_call.1} parent=5 // pred_check
        %p160 = pneg %p159
      $region18: #{tpu_custom_call.1} parent=5 // pred_check_branch
        %162 = sbr.rel (%p160) target = $region20
      $region19: #{tpu_custom_call.1} parent=5 // pred_region
        // Predicated region
        $region21: #{tpu_custom_call.1} parent=19 // pred_check
          %p163 = pneg %p36
        $region22: #{tpu_custom_call.1} parent=19 // pred_check_branch
          %165 = sbr.rel (%p163) target = $region24
        $region23: #{tpu_custom_call.1} parent=19 // pred_region
          %p166 = scmp.lt.s32.totalorder %s16, 1
          %s167 = scalar_select %p166, %s16, 1
          %s168 = smul.addr %s167, 8
          %s169 = scalar_lea.vmem %s0, %s168
        $region24: #{tpu_custom_call.1} parent=19 // pred_fallthru
          _
        // Predicated region
        $region25: #{tpu_custom_call.1} parent=19 // pred_check
          %p170 = pneg %p62
        $region26: #{tpu_custom_call.1} parent=19 // pred_check_branch
          %172 = sbr.rel (%p170) target = $region28
        $region27: #{tpu_custom_call.1} parent=19 // pred_region
          %p173 = scmp.lt.s32.totalorder %s16, 1
          %s174 = scalar_select %p173, %s16, 1
          %s175 = smul.addr %s174, 8
          %s176 = smul.addr %s175, 8
          %s177 = scalar_lea.vmem %s1, %s176
        $region28: #{tpu_custom_call.1} parent=19 // pred_fallthru
          _
        // Predicated region
        $region29: #{tpu_custom_call.1} parent=19 // pred_check
          %p178 = pneg %p88
        $region30: #{tpu_custom_call.1} parent=19 // pred_check_branch
          %180 = sbr.rel (%p178) target = $region32
        $region31: #{tpu_custom_call.1} parent=19 // pred_region
          %s181 = sand.u32 %s78, 1
          %s182 = scalar_lea.sflag [#allocation3], %s181
          %s183 = sand.u32 %s78, 1
          %s184 = smul.addr %s183, 64
          %s185 = scalar_lea.vmem [#allocation2], %s184
          %s187 = ssub.s32 1024, 1024
          %188 = vsyncadd %s182, %s187
          %s189 = smul.addr %s16, 8
          %s190 = smul.addr %s189, 128
          %s191 = scalar_lea.hbm %s2, %s190
          %s193 = sshll.u32 %s185, 4
          %s194 = int_to_ptr.vmem [resolvable:$true] %s193
          %196 = dma.hbm_to_vmem [thread:$0]  %s191, 1024, %s194, %s182
        $region32: #{tpu_custom_call.1} parent=19 // pred_fallthru
          _
      $region20: #{tpu_custom_call.1} parent=5 // pred_fallthru
        _
      %p197 = scmp.le.s32.totalorder 1, %s16
      %p198 = scmp.lt.s32.totalorder %s16, 3
      %p199 = pnand %p197, %p198
      %p200 = pneg %p199
      // Predicated region
      $region33: #{tpu_custom_call.1} parent=5 // pred_check
        _
      $region34: #{tpu_custom_call.1} parent=5 // pred_check_branch
        %202 = sbr.rel (%p199) target = $region36
      $region35: #{tpu_custom_call.1} parent=5 // pred_region
        %s203 = ssub.s32 %s16, 1
        %s204 = sand.u32 %s81, 1
        %s205 = scalar_lea.sflag [#allocation3], %s204
        %s206 = sand.u32 %s81, 1
        %s207 = smul.addr %s206, 64
        %s208 = scalar_lea.vmem [#allocation2], %s207
        // Predicated region
        $region37: #{tpu_custom_call.1} parent=35 // pred_check
          %p209 = pneg %p94
        $region38: #{tpu_custom_call.1} parent=35 // pred_check_branch
          %211 = sbr.rel (%p209) target = $region40
        $region39: #{tpu_custom_call.1} parent=35 // pred_region
          %212 = dma.done %s205, 1024
        $region40: #{tpu_custom_call.1} parent=35 // pred_fallthru
          _
        %p213 = scmp.lt.s32.totalorder %s21, 1
        %s214 = scalar_select %p213, %s21, 1
        %s215 = smul.addr %s214, 8
        %s216 = scalar_lea.vmem %s0, %s215
        %p217 = pneg %p42
        %p218 = pneg %p39
        %p219 = scmp.lt.s32.totalorder %s21, 1
        %s220 = scalar_select %p219, %s21, 1
        %s221 = smul.addr %s220, 8
        %s222 = smul.addr %s221, 8
        %s223 = scalar_lea.vmem %s1, %s222
        %p224 = pneg %p68
        %p225 = pneg %p65
        %s226 = sand.u32 %s81, 1
        %s227 = scalar_lea.sflag [#allocation3], %s226
        %s228 = sand.u32 %s81, 1
        %s229 = smul.addr %s228, 64
        %s230 = scalar_lea.vmem [#allocation2], %s229
        %p231 = pneg %p94
        %p232 = pneg %p91
        %p233 = pneg %p115
        %p234 = pneg %p112
        %p235 = pneg %p141
        %p236 = pneg %p138
        %s237 = sand.u32 %s128, 1
        %s238 = scalar_lea.sflag [#allocation4], %s237
        %s239 = sand.u32 %s128, 1
        %s240 = smul.addr %s239, 64
        %s241 = scalar_lea.vmem [#allocation5], %s240
        %p242 = scmp.lt.s32.totalorder %s21, 1
        %s243 = scalar_select %p242, %s21, 1
        %s244 = smul.addr %s243, 8
        %s245 = scalar_lea.vmem %s0, %s244
        %p246 = scmp.lt.s32.totalorder %s21, 1
        %s247 = scalar_select %p246, %s21, 1
        %s248 = smul.addr %s247, 8
        %s249 = smul.addr %s248, 8
        %s250 = scalar_lea.vmem %s1, %s249
        %v251 = vld [vmem:[%s245] sm:$0xff]
        %vm252 = vcmask 64512
        %v253 = vsel %vm252, %v251, 0.0
        %254 = vadd.xlane.f32.xlu0 %v253
        %v255 = vpop.xlane.xlu0 %254
        %v256 = vrcp.pop 8.0
        %v257 = vmul.f32 %v255, %v256
        %v258 = vld [vmem:[%s250] sm:$0xff]
        %v259 = vld [vmem:[%s250 + $0x8] sm:$0xff]
        %v260 = vld [vmem:[%s250 + $0x10] sm:$0xff]
        %v261 = vld [vmem:[%s250 + $0x18] sm:$0xff]
        %v262 = vld [vmem:[%s250 + $0x20] sm:$0xff]
        %v263 = vld [vmem:[%s250 + $0x28] sm:$0xff]
        %v264 = vld [vmem:[%s250 + $0x30] sm:$0xff]
        %v265 = vld [vmem:[%s250 + $0x38] sm:$0xff]
        %v267 = vsel %vm252, %v251, 0
        %v269 = vand.u32 %v259, 4294901760
        %270 = vmatprep.subr.mxu0 %v269
        %v271 = vand.u32 %v258, 4294901760
        %272 = vmatpush1.msra.mxu0 %v271
        %273 = vmatprep.subr.mxu0 0.0
        %274 = vmatpush1.msra.mxu0 0.0
        %275 = vmatprep.subr.mxu0 0.0
        %276 = vmatpush1.msra.mxu0 0.0
        %277 = vmatprep.subr.mxu0 0.0
        %278 = vmatpush1.msra.mxu0 0.0
        %279 = vmatprep.subr.mxu0 0.0
        %280 = vmatpush1.msra.mxu0 0.0
        %281 = vmatprep.subr.mxu0 0.0
        %282 = vmatpush1.msra.mxu0 0.0
        %283 = vmatprep.subr.mxu0 0.0
        %284 = vmatpush1.msra.mxu0 0.0
        %285 = vmatprep.subr.mxu0 0.0
        %286 = vmatpush1.msra.mxu0 0.0
        %287 = vmatprep.subr.mxu0 0.0
        %288 = vmatpush1.msra.mxu0 0.0
        %289 = vmatprep.subr.mxu0 0.0
        %290 = vmatpush1.msra.mxu0 0.0
        %291 = vmatprep.subr.mxu0 0.0
        %292 = vmatpush1.msra.mxu0 0.0
        %293 = vmatprep.subr.mxu0 0.0
        %294 = vmatpush1.msra.mxu0 0.0
        %295 = vmatprep.subr.mxu0 0.0
        %296 = vmatpush1.msra.mxu0 0.0
        %297 = vmatprep.subr.mxu0 0.0
        %298 = vmatpush1.msra.mxu0 0.0
        %299 = vmatprep.subr.mxu0 0.0
        %300 = vmatpush1.msra.mxu0 0.0
        %301 = vmatprep.subr.mxu0 0.0
        %302 = vmatpush1.msra.mxu0 0.0
        %303 = vmatprep.subr.mxu0 0.0
        %304 = vmatpush1.msra.mxu0 0.0
        %305 = vmatprep.subr.mxu0 0.0
        %306 = vmatpush1.msra.mxu0 0.0
        %307 = vmatprep.subr.mxu0 0.0
        %308 = vmatpush1.msra.mxu0 0.0
        %309 = vmatprep.subr.mxu0 0.0
        %310 = vmatpush1.msra.mxu0 0.0
        %311 = vmatprep.subr.mxu0 0.0
        %312 = vmatpush1.msra.mxu0 0.0
        %313 = vmatprep.subr.mxu0 0.0
        %314 = vmatpush1.msra.mxu0 0.0
        %315 = vmatprep.subr.mxu0 0.0
        %316 = vmatpush1.msra.mxu0 0.0
        %317 = vmatprep.subr.mxu0 0.0
        %318 = vmatpush1.msra.mxu0 0.0
        %319 = vmatprep.subr.mxu0 0.0
        %320 = vmatpush1.msra.mxu0 0.0
        %321 = vmatprep.subr.mxu0 0.0
        %322 = vmatpush1.msra.mxu0 0.0
        %323 = vmatprep.subr.mxu0 0.0
        %324 = vmatpush1.msra.mxu0 0.0
        %325 = vmatprep.subr.mxu0 0.0
        %326 = vmatpush1.msra.mxu0 0.0
        %327 = vmatprep.subr.mxu0 0.0
        %328 = vmatpush1.msra.mxu0 0.0
        %329 = vmatprep.subr.mxu0 0.0
        %330 = vmatpush1.msra.mxu0 0.0
        %331 = vmatprep.subr.mxu0 0.0
        %332 = vmatpush1.msra.mxu0 0.0
        %333 = vmatprep.subr.mxu0 0.0
        %334 = vmatpush1.msra.mxu0 0.0
        %335 = vmatprep.mubr.f32.mxu0 0.0
        %v336 = vand.u32 %v267, 4294901760
        %v337 = vsub.f32 %v267, %v336
        %v338 = vand.u32 %v337, 4294901760
        %v339 = vsub.f32 %v337, %v338
        %v340 = vand.u32 %v339, 4294901760
        %341 = vmatmul.mubr.f32.gmra.mrb[0].mxu0 %v340
        %v342 = vpop.f32.mrb[0].mxu0
        %v343 = vadd.f32 0.0, %v342
        %v344 = vpop.f32.mrb[0].mxu0
        %v345 = vadd.f32 0.0, %v344
        %346 = vdwg.mxu0
        %v347 = vand.u32 %v259, 4294901760
        %v348 = vsub.f32 %v259, %v347
        %v349 = vand.u32 %v348, 4294901760
        %v350 = vsub.f32 %v348, %v349
        %v351 = vand.u32 %v350, 4294901760
        %352 = vmatprep.subr.mxu0 %v351
        %v353 = vand.u32 %v258, 4294901760
        %v354 = vsub.f32 %v258, %v353
        %v355 = vand.u32 %v354, 4294901760
        %v356 = vsub.f32 %v354, %v355
        %v357 = vand.u32 %v356, 4294901760
        %358 = vmatpush1.msra.mxu0 %v357
        %359 = vmatprep.subr.mxu0 0.0
        %360 = vmatpush1.msra.mxu0 0.0
        %361 = vmatprep.subr.mxu0 0.0
        %362 = vmatpush1.msra.mxu0 0.0
        %363 = vmatprep.subr.mxu0 0.0
        %364 = vmatpush1.msra.mxu0 0.0
        %365 = vmatprep.subr.mxu0 0.0
        %366 = vmatpush1.msra.mxu0 0.0
        %367 = vmatprep.subr.mxu0 0.0
        %368 = vmatpush1.msra.mxu0 0.0
        %369 = vmatprep.subr.mxu0 0.0
        %370 = vmatpush1.msra.mxu0 0.0
        %371 = vmatprep.subr.mxu0 0.0
        %372 = vmatpush1.msra.mxu0 0.0
        %373 = vmatprep.subr.mxu0 0.0
        %374 = vmatpush1.msra.mxu0 0.0
        %375 = vmatprep.subr.mxu0 0.0
        %376 = vmatpush1.msra.mxu0 0.0
        %377 = vmatprep.subr.mxu0 0.0
        %378 = vmatpush1.msra.mxu0 0.0
        %379 = vmatprep.subr.mxu0 0.0
        %380 = vmatpush1.msra.mxu0 0.0
        %381 = vmatprep.subr.mxu0 0.0
        %382 = vmatpush1.msra.mxu0 0.0
        %383 = vmatprep.subr.mxu0 0.0
        %384 = vmatpush1.msra.mxu0 0.0
        %385 = vmatprep.subr.mxu0 0.0
        %386 = vmatpush1.msra.mxu0 0.0
        %387 = vmatprep.subr.mxu0 0.0
        %388 = vmatpush1.msra.mxu0 0.0
        %389 = vmatprep.subr.mxu0 0.0
        %390 = vmatpush1.msra.mxu0 0.0
        %391 = vmatprep.subr.mxu0 0.0
        %392 = vmatpush1.msra.mxu0 0.0
        %393 = vmatprep.subr.mxu0 0.0
        %394 = vmatpush1.msra.mxu0 0.0
        %395 = vmatprep.subr.mxu0 0.0
        %396 = vmatpush1.msra.mxu0 0.0
        %397 = vmatprep.subr.mxu0 0.0
        %398 = vmatpush1.msra.mxu0 0.0
        %399 = vmatprep.subr.mxu0 0.0
        %400 = vmatpush1.msra.mxu0 0.0
        %401 = vmatprep.subr.mxu0 0.0
        %402 = vmatpush1.msra.mxu0 0.0
        %403 = vmatprep.subr.mxu0 0.0
        %404 = vmatpush1.msra.mxu0 0.0
        %405 = vmatprep.subr.mxu0 0.0
        %406 = vmatpush1.msra.mxu0 0.0
        %407 = vmatprep.subr.mxu0 0.0
        %408 = vmatpush1.msra.mxu0 0.0
        %409 = vmatprep.subr.mxu0 0.0
        %410 = vmatpush1.msra.mxu0 0.0
        %411 = vmatprep.subr.mxu0 0.0
        %412 = vmatpush1.msra.mxu0 0.0
        %413 = vmatprep.subr.mxu0 0.0
        %414 = vmatpush1.msra.mxu0 0.0
        %415 = vmatprep.subr.mxu0 0.0
        %416 = vmatpush1.msra.mxu0 0.0
        %417 = vmatprep.subr.mxu0 0.0
        %418 = vmatpush1.msra.mxu0 0.0
        %419 = vmatprep.subr.mxu0 0.0
        %420 = vmatpush1.msra.mxu0 0.0
        %421 = vmatprep.mubr.f32.mxu0 0.0
        %v422 = vand.u32 %v267, 4294901760
        %423 = vmatmul.mubr.f32.gmra.mrb[0].mxu0 %v422
        %v424 = vpop.f32.mrb[0].mxu0
        %v425 = vadd.f32 %v343, %v424
        %v426 = vpop.f32.mrb[0].mxu0
        %v427 = vadd.f32 %v345, %v426
        %428 = vdwg.mxu0
        %v429 = vand.u32 %v259, 4294901760
        %v430 = vsub.f32 %v259, %v429
        %431 = vmatprep.subr.mxu0 %v430
        %v432 = vand.u32 %v258, 4294901760
        %v433 = vsub.f32 %v258, %v432
        %434 = vmatpush1.msra.mxu0 %v433
        %435 = vmatprep.subr.mxu0 0.0
        %436 = vmatpush1.msra.mxu0 0.0
        %437 = vmatprep.subr.mxu0 0.0
        %438 = vmatpush1.msra.mxu0 0.0
        %439 = vmatprep.subr.mxu0 0.0
        %440 = vmatpush1.msra.mxu0 0.0
        %441 = vmatprep.subr.mxu0 0.0
        %442 = vmatpush1.msra.mxu0 0.0
        %443 = vmatprep.subr.mxu0 0.0
        %444 = vmatpush1.msra.mxu0 0.0
        %445 = vmatprep.subr.mxu0 0.0
        %446 = vmatpush1.msra.mxu0 0.0
        %447 = vmatprep.subr.mxu0 0.0
        %448 = vmatpush1.msra.mxu0 0.0
        %449 = vmatprep.subr.mxu0 0.0
        %450 = vmatpush1.msra.mxu0 0.0
        %451 = vmatprep.subr.mxu0 0.0
        %452 = vmatpush1.msra.mxu0 0.0
        %453 = vmatprep.subr.mxu0 0.0
        %454 = vmatpush1.msra.mxu0 0.0
        %455 = vmatprep.subr.mxu0 0.0
        %456 = vmatpush1.msra.mxu0 0.0
        %457 = vmatprep.subr.mxu0 0.0
        %458 = vmatpush1.msra.mxu0 0.0
        %459 = vmatprep.subr.mxu0 0.0
        %460 = vmatpush1.msra.mxu0 0.0
        %461 = vmatprep.subr.mxu0 0.0
        %462 = vmatpush1.msra.mxu0 0.0
        %463 = vmatprep.subr.mxu0 0.0
        %464 = vmatpush1.msra.mxu0 0.0
        %465 = vmatprep.subr.mxu0 0.0
        %466 = vmatpush1.msra.mxu0 0.0
        %467 = vmatprep.subr.mxu0 0.0
        %468 = vmatpush1.msra.mxu0 0.0
        %469 = vmatprep.subr.mxu0 0.0
        %470 = vmatpush1.msra.mxu0 0.0
        %471 = vmatprep.subr.mxu0 0.0
        %472 = vmatpush1.msra.mxu0 0.0
        %473 = vmatprep.subr.mxu0 0.0
        %474 = vmatpush1.msra.mxu0 0.0
        %475 = vmatprep.subr.mxu0 0.0
        %476 = vmatpush1.msra.mxu0 0.0
        %477 = vmatprep.subr.mxu0 0.0
        %478 = vmatpush1.msra.mxu0 0.0
        %479 = vmatprep.subr.mxu0 0.0
        %480 = vmatpush1.msra.mxu0 0.0
        %481 = vmatprep.subr.mxu0 0.0
        %482 = vmatpush1.msra.mxu0 0.0
        %483 = vmatprep.subr.mxu0 0.0
        %484 = vmatpush1.msra.mxu0 0.0
        %485 = vmatprep.subr.mxu0 0.0
        %486 = vmatpush1.msra.mxu0 0.0
        %487 = vmatprep.subr.mxu0 0.0
        %488 = vmatpush1.msra.mxu0 0.0
        %489 = vmatprep.subr.mxu0 0.0
        %490 = vmatpush1.msra.mxu0 0.0
        %491 = vmatprep.subr.mxu0 0.0
        %492 = vmatpush1.msra.mxu0 0.0
        %493 = vmatprep.subr.mxu0 0.0
        %494 = vmatpush1.msra.mxu0 0.0
        %495 = vmatprep.subr.mxu0 0.0
        %496 = vmatpush1.msra.mxu0 0.0
        %497 = vmatprep.mubr.f32.mxu0 0.0
        %v498 = vand.u32 %v267, 4294901760
        %v499 = vsub.f32 %v267, %v498
        %500 = vmatmul.mubr.f32.gmra.mrb[0].mxu0 %v499
        %v501 = vpop.f32.mrb[0].mxu0
        %v502 = vadd.f32 %v425, %v501
        %v503 = vpop.f32.mrb[0].mxu0
        %v504 = vadd.f32 %v427, %v503
        %505 = vdwg.mxu0
        %v506 = vand.u32 %v259, 4294901760
        %507 = vmatprep.subr.mxu0 %v506
        %v508 = vand.u32 %v258, 4294901760
        %509 = vmatpush1.msra.mxu0 %v508
        %510 = vmatprep.subr.mxu0 0.0
        %511 = vmatpush1.msra.mxu0 0.0
        %512 = vmatprep.subr.mxu0 0.0
        %513 = vmatpush1.msra.mxu0 0.0
        %514 = vmatprep.subr.mxu0 0.0
        %515 = vmatpush1.msra.mxu0 0.0
        %516 = vmatprep.subr.mxu0 0.0
        %517 = vmatpush1.msra.mxu0 0.0
        %518 = vmatprep.subr.mxu0 0.0
        %519 = vmatpush1.msra.mxu0 0.0
        %520 = vmatprep.subr.mxu0 0.0
        %521 = vmatpush1.msra.mxu0 0.0
        %522 = vmatprep.subr.mxu0 0.0
        %523 = vmatpush1.msra.mxu0 0.0
        %524 = vmatprep.subr.mxu0 0.0
        %525 = vmatpush1.msra.mxu0 0.0
        %526 = vmatprep.subr.mxu0 0.0
        %527 = vmatpush1.msra.mxu0 0.0
        %528 = vmatprep.subr.mxu0 0.0
        %529 = vmatpush1.msra.mxu0 0.0
        %530 = vmatprep.subr.mxu0 0.0
        %531 = vmatpush1.msra.mxu0 0.0
        %532 = vmatprep.subr.mxu0 0.0
        %533 = vmatpush1.msra.mxu0 0.0
        %534 = vmatprep.subr.mxu0 0.0
        %535 = vmatpush1.msra.mxu0 0.0
        %536 = vmatprep.subr.mxu0 0.0
        %537 = vmatpush1.msra.mxu0 0.0
        %538 = vmatprep.subr.mxu0 0.0
        %539 = vmatpush1.msra.mxu0 0.0
        %540 = vmatprep.subr.mxu0 0.0
        %541 = vmatpush1.msra.mxu0 0.0
        %542 = vmatprep.subr.mxu0 0.0
        %543 = vmatpush1.msra.mxu0 0.0
        %544 = vmatprep.subr.mxu0 0.0
        %545 = vmatpush1.msra.mxu0 0.0
        %546 = vmatprep.subr.mxu0 0.0
        %547 = vmatpush1.msra.mxu0 0.0
        %548 = vmatprep.subr.mxu0 0.0
        %549 = vmatpush1.msra.mxu0 0.0
        %550 = vmatprep.subr.mxu0 0.0
        %551 = vmatpush1.msra.mxu0 0.0
        %552 = vmatprep.subr.mxu0 0.0
        %553 = vmatpush1.msra.mxu0 0.0
        %554 = vmatprep.subr.mxu0 0.0
        %555 = vmatpush1.msra.mxu0 0.0
        %556 = vmatprep.subr.mxu0 0.0
        %557 = vmatpush1.msra.mxu0 0.0
        %558 = vmatprep.subr.mxu0 0.0
        %559 = vmatpush1.msra.mxu0 0.0
        %560 = vmatprep.subr.mxu0 0.0
        %561 = vmatpush1.msra.mxu0 0.0
        %562 = vmatprep.subr.mxu0 0.0
        %563 = vmatpush1.msra.mxu0 0.0
        %564 = vmatprep.subr.mxu0 0.0
        %565 = vmatpush1.msra.mxu0 0.0
        %566 = vmatprep.subr.mxu0 0.0
        %567 = vmatpush1.msra.mxu0 0.0
        %568 = vmatprep.subr.mxu0 0.0
        %569 = vmatpush1.msra.mxu0 0.0
        %570 = vmatprep.subr.mxu0 0.0
        %571 = vmatpush1.msra.mxu0 0.0
        %572 = vmatprep.mubr.f32.mxu0 0.0
        %v573 = vand.u32 %v267, 4294901760
        %v574 = vsub.f32 %v267, %v573
        %v575 = vand.u32 %v574, 4294901760
        %576 = vmatmul.mubr.f32.gmra.mrb[0].mxu0 %v575
        %v577 = vpop.f32.mrb[0].mxu0
        %v578 = vadd.f32 %v502, %v577
        %v579 = vpop.f32.mrb[0].mxu0
        %v580 = vadd.f32 %v504, %v579
        %581 = vdwg.mxu0
        %v582 = vand.u32 %v259, 4294901760
        %v583 = vsub.f32 %v259, %v582
        %v584 = vand.u32 %v583, 4294901760
        %585 = vmatprep.subr.mxu0 %v584
        %v586 = vand.u32 %v258, 4294901760
        %v587 = vsub.f32 %v258, %v586
        %v588 = vand.u32 %v587, 4294901760
        %589 = vmatpush1.msra.mxu0 %v588
        %590 = vmatprep.subr.mxu0 0.0
        %591 = vmatpush1.msra.mxu0 0.0
        %592 = vmatprep.subr.mxu0 0.0
        %593 = vmatpush1.msra.mxu0 0.0
        %594 = vmatprep.subr.mxu0 0.0
        %595 = vmatpush1.msra.mxu0 0.0
        %596 = vmatprep.subr.mxu0 0.0
        %597 = vmatpush1.msra.mxu0 0.0
        %598 = vmatprep.subr.mxu0 0.0
        %599 = vmatpush1.msra.mxu0 0.0
        %600 = vmatprep.subr.mxu0 0.0
        %601 = vmatpush1.msra.mxu0 0.0
        %602 = vmatprep.subr.mxu0 0.0
        %603 = vmatpush1.msra.mxu0 0.0
        %604 = vmatprep.subr.mxu0 0.0
        %605 = vmatpush1.msra.mxu0 0.0
        %606 = vmatprep.subr.mxu0 0.0
        %607 = vmatpush1.msra.mxu0 0.0
        %608 = vmatprep.subr.mxu0 0.0
        %609 = vmatpush1.msra.mxu0 0.0
        %610 = vmatprep.subr.mxu0 0.0
        %611 = vmatpush1.msra.mxu0 0.0
        %612 = vmatprep.subr.mxu0 0.0
        %613 = vmatpush1.msra.mxu0 0.0
        %614 = vmatprep.subr.mxu0 0.0
        %615 = vmatpush1.msra.mxu0 0.0
        %616 = vmatprep.subr.mxu0 0.0
        %617 = vmatpush1.msra.mxu0 0.0
        %618 = vmatprep.subr.mxu0 0.0
        %619 = vmatpush1.msra.mxu0 0.0
        %620 = vmatprep.subr.mxu0 0.0
        %621 = vmatpush1.msra.mxu0 0.0
        %622 = vmatprep.subr.mxu0 0.0
        %623 = vmatpush1.msra.mxu0 0.0
        %624 = vmatprep.subr.mxu0 0.0
        %625 = vmatpush1.msra.mxu0 0.0
        %626 = vmatprep.subr.mxu0 0.0
        %627 = vmatpush1.msra.mxu0 0.0
        %628 = vmatprep.subr.mxu0 0.0
        %629 = vmatpush1.msra.mxu0 0.0
        %630 = vmatprep.subr.mxu0 0.0
        %631 = vmatpush1.msra.mxu0 0.0
        %632 = vmatprep.subr.mxu0 0.0
        %633 = vmatpush1.msra.mxu0 0.0
        %634 = vmatprep.subr.mxu0 0.0
        %635 = vmatpush1.msra.mxu0 0.0
        %636 = vmatprep.subr.mxu0 0.0
        %637 = vmatpush1.msra.mxu0 0.0
        %638 = vmatprep.subr.mxu0 0.0
        %639 = vmatpush1.msra.mxu0 0.0
        %640 = vmatprep.subr.mxu0 0.0
        %641 = vmatpush1.msra.mxu0 0.0
        %642 = vmatprep.subr.mxu0 0.0
        %643 = vmatpush1.msra.mxu0 0.0
        %644 = vmatprep.subr.mxu0 0.0
        %645 = vmatpush1.msra.mxu0 0.0
        %646 = vmatprep.subr.mxu0 0.0
        %647 = vmatpush1.msra.mxu0 0.0
        %648 = vmatprep.subr.mxu0 0.0
        %649 = vmatpush1.msra.mxu0 0.0
        %650 = vmatprep.subr.mxu0 0.0
        %651 = vmatpush1.msra.mxu0 0.0
        %652 = vmatprep.mubr.f32.mxu0 0.0
        %v653 = vand.u32 %v267, 4294901760
        %654 = vmatmul.mubr.f32.gmra.mrb[0].mxu0 %v653
        %v655 = vpop.f32.mrb[0].mxu0
        %v656 = vadd.f32 %v578, %v655
        %v657 = vpop.f32.mrb[0].mxu0
        %v658 = vadd.f32 %v580, %v657
        %659 = vdwg.mxu0
        %v660 = vand.u32 %v259, 4294901760
        %661 = vmatprep.subr.mxu0 %v660
        %v662 = vand.u32 %v258, 4294901760
        %663 = vmatpush1.msra.mxu0 %v662
        %664 = vmatprep.subr.mxu0 0.0
        %665 = vmatpush1.msra.mxu0 0.0
        %666 = vmatprep.subr.mxu0 0.0
        %667 = vmatpush1.msra.mxu0 0.0
        %668 = vmatprep.subr.mxu0 0.0
        %669 = vmatpush1.msra.mxu0 0.0
        %670 = vmatprep.subr.mxu0 0.0
        %671 = vmatpush1.msra.mxu0 0.0
        %672 = vmatprep.subr.mxu0 0.0
        %673 = vmatpush1.msra.mxu0 0.0
        %674 = vmatprep.subr.mxu0 0.0
        %675 = vmatpush1.msra.mxu0 0.0
        %676 = vmatprep.subr.mxu0 0.0
        %677 = vmatpush1.msra.mxu0 0.0
        %678 = vmatprep.subr.mxu0 0.0
        %679 = vmatpush1.msra.mxu0 0.0
        %680 = vmatprep.subr.mxu0 0.0
        %681 = vmatpush1.msra.mxu0 0.0
        %682 = vmatprep.subr.mxu0 0.0
        %683 = vmatpush1.msra.mxu0 0.0
        %684 = vmatprep.subr.mxu0 0.0
        %685 = vmatpush1.msra.mxu0 0.0
        %686 = vmatprep.subr.mxu0 0.0
        %687 = vmatpush1.msra.mxu0 0.0
        %688 = vmatprep.subr.mxu0 0.0
        %689 = vmatpush1.msra.mxu0 0.0
        %690 = vmatprep.subr.mxu0 0.0
        %691 = vmatpush1.msra.mxu0 0.0
        %692 = vmatprep.subr.mxu0 0.0
        %693 = vmatpush1.msra.mxu0 0.0
        %694 = vmatprep.subr.mxu0 0.0
        %695 = vmatpush1.msra.mxu0 0.0
        %696 = vmatprep.subr.mxu0 0.0
        %697 = vmatpush1.msra.mxu0 0.0
        %698 = vmatprep.subr.mxu0 0.0
        %699 = vmatpush1.msra.mxu0 0.0
        %700 = vmatprep.subr.mxu0 0.0
        %701 = vmatpush1.msra.mxu0 0.0
        %702 = vmatprep.subr.mxu0 0.0
        %703 = vmatpush1.msra.mxu0 0.0
        %704 = vmatprep.subr.mxu0 0.0
        %705 = vmatpush1.msra.mxu0 0.0
        %706 = vmatprep.subr.mxu0 0.0
        %707 = vmatpush1.msra.mxu0 0.0
        %708 = vmatprep.subr.mxu0 0.0
        %709 = vmatpush1.msra.mxu0 0.0
        %710 = vmatprep.subr.mxu0 0.0
        %711 = vmatpush1.msra.mxu0 0.0
        %712 = vmatprep.subr.mxu0 0.0
        %713 = vmatpush1.msra.mxu0 0.0
        %714 = vmatprep.subr.mxu0 0.0
        %715 = vmatpush1.msra.mxu0 0.0
        %716 = vmatprep.subr.mxu0 0.0
        %717 = vmatpush1.msra.mxu0 0.0
        %718 = vmatprep.subr.mxu0 0.0
        %719 = vmatpush1.msra.mxu0 0.0
        %720 = vmatprep.subr.mxu0 0.0
        %721 = vmatpush1.msra.mxu0 0.0
        %722 = vmatprep.subr.mxu0 0.0
        %723 = vmatpush1.msra.mxu0 0.0
        %724 = vmatprep.subr.mxu0 0.0
        %725 = vmatpush1.msra.mxu0 0.0
        %726 = vmatprep.mubr.f32.mxu0 0.0
        %v727 = vand.u32 %v267, 4294901760
        %728 = vmatmul.mubr.f32.gmra.mrb[0].mxu0 %v727
        %v729 = vpop.f32.mrb[0].mxu0
        %v730 = vadd.f32 %v656, %v729
        %v731 = vpop.f32.mrb[0].mxu0
        %v732 = vadd.f32 %v658, %v731
        %733 = vdwg.mxu0
        %v734 = vand.u32 %v261, 4294901760
        %735 = vmatprep.subr.mxu0 %v734
        %v736 = vand.u32 %v260, 4294901760
        %737 = vmatpush1.msra.mxu0 %v736
        %738 = vmatprep.subr.mxu0 0.0
        %739 = vmatpush1.msra.mxu0 0.0
        %740 = vmatprep.subr.mxu0 0.0
        %741 = vmatpush1.msra.mxu0 0.0
        %742 = vmatprep.subr.mxu0 0.0
        %743 = vmatpush1.msra.mxu0 0.0
        %744 = vmatprep.subr.mxu0 0.0
        %745 = vmatpush1.msra.mxu0 0.0
        %746 = vmatprep.subr.mxu0 0.0
        %747 = vmatpush1.msra.mxu0 0.0
        %748 = vmatprep.subr.mxu0 0.0
        %749 = vmatpush1.msra.mxu0 0.0
        %750 = vmatprep.subr.mxu0 0.0
        %751 = vmatpush1.msra.mxu0 0.0
        %752 = vmatprep.subr.mxu0 0.0
        %753 = vmatpush1.msra.mxu0 0.0
        %754 = vmatprep.subr.mxu0 0.0
        %755 = vmatpush1.msra.mxu0 0.0
        %756 = vmatprep.subr.mxu0 0.0
        %757 = vmatpush1.msra.mxu0 0.0
        %758 = vmatprep.subr.mxu0 0.0
        %759 = vmatpush1.msra.mxu0 0.0
        %760 = vmatprep.subr.mxu0 0.0
        %761 = vmatpush1.msra.mxu0 0.0
        %762 = vmatprep.subr.mxu0 0.0
        %763 = vmatpush1.msra.mxu0 0.0
        %764 = vmatprep.subr.mxu0 0.0
        %765 = vmatpush1.msra.mxu0 0.0
        %766 = vmatprep.subr.mxu0 0.0
        %767 = vmatpush1.msra.mxu0 0.0
        %768 = vmatprep.subr.mxu0 0.0
        %769 = vmatpush1.msra.mxu0 0.0
        %770 = vmatprep.subr.mxu0 0.0
        %771 = vmatpush1.msra.mxu0 0.0
        %772 = vmatprep.subr.mxu0 0.0
        %773 = vmatpush1.msra.mxu0 0.0
        %774 = vmatprep.subr.mxu0 0.0
        %775 = vmatpush1.msra.mxu0 0.0
        %776 = vmatprep.subr.mxu0 0.0
        %777 = vmatpush1.msra.mxu0 0.0
        %778 = vmatprep.subr.mxu0 0.0
        %779 = vmatpush1.msra.mxu0 0.0
        %780 = vmatprep.subr.mxu0 0.0
        %781 = vmatpush1.msra.mxu0 0.0
        %782 = vmatprep.subr.mxu0 0.0
        %783 = vmatpush1.msra.mxu0 0.0
        %784 = vmatprep.subr.mxu0 0.0
        %785 = vmatpush1.msra.mxu0 0.0
        %786 = vmatprep.subr.mxu0 0.0
        %787 = vmatpush1.msra.mxu0 0.0
        %788 = vmatprep.subr.mxu0 0.0
        %789 = vmatpush1.msra.mxu0 0.0
        %790 = vmatprep.subr.mxu0 0.0
        %791 = vmatpush1.msra.mxu0 0.0
        %792 = vmatprep.subr.mxu0 0.0
        %793 = vmatpush1.msra.mxu0 0.0
        %794 = vmatprep.subr.mxu0 0.0
        %795 = vmatpush1.msra.mxu0 0.0
        %796 = vmatprep.subr.mxu0 0.0
        %797 = vmatpush1.msra.mxu0 0.0
        %798 = vmatprep.subr.mxu0 0.0
        %799 = vmatpush1.msra.mxu0 0.0
        %800 = vmatprep.mubr.f32.mxu0 0.0
        %v801 = vand.u32 %v267, 4294901760
        %v802 = vsub.f32 %v267, %v801
        %v803 = vand.u32 %v802, 4294901760
        %v804 = vsub.f32 %v802, %v803
        %v805 = vand.u32 %v804, 4294901760
        %806 = vmatmul.mubr.f32.gmra.mrb[0].mxu0 %v805
        %v807 = vpop.f32.mrb[0].mxu0
        %v808 = vadd.f32 0.0, %v807
        %v809 = vpop.f32.mrb[0].mxu0
        %v810 = vadd.f32 0.0, %v809
        %811 = vdwg.mxu0
        %v812 = vand.u32 %v261, 4294901760
        %v813 = vsub.f32 %v261, %v812
        %v814 = vand.u32 %v813, 4294901760
        %v815 = vsub.f32 %v813, %v814
        %v816 = vand.u32 %v815, 4294901760
        %817 = vmatprep.subr.mxu0 %v816
        %v818 = vand.u32 %v260, 4294901760
        %v819 = vsub.f32 %v260, %v818
        %v820 = vand.u32 %v819, 4294901760
        %v821 = vsub.f32 %v819, %v820
        %v822 = vand.u32 %v821, 4294901760
        %823 = vmatpush1.msra.mxu0 %v822
        %824 = vmatprep.subr.mxu0 0.0
        %825 = vmatpush1.msra.mxu0 0.0
        %826 = vmatprep.subr.mxu0 0.0
        %827 = vmatpush1.msra.mxu0 0.0
        %828 = vmatprep.subr.mxu0 0.0
        %829 = vmatpush1.msra.mxu0 0.0
        %830 = vmatprep.subr.mxu0 0.0
        %831 = vmatpush1.msra.mxu0 0.0
        %832 = vmatprep.subr.mxu0 0.0
        %833 = vmatpush1.msra.mxu0 0.0
        %834 = vmatprep.subr.mxu0 0.0
        %835 = vmatpush1.msra.mxu0 0.0
        %836 = vmatprep.subr.mxu0 0.0
        %837 = vmatpush1.msra.mxu0 0.0
        %838 = vmatprep.subr.mxu0 0.0
        %839 = vmatpush1.msra.mxu0 0.0
        %840 = vmatprep.subr.mxu0 0.0
        %841 = vmatpush1.msra.mxu0 0.0
        %842 = vmatprep.subr.mxu0 0.0
        %843 = vmatpush1.msra.mxu0 0.0
        %844 = vmatprep.subr.mxu0 0.0
        %845 = vmatpush1.msra.mxu0 0.0
        %846 = vmatprep.subr.mxu0 0.0
        %847 = vmatpush1.msra.mxu0 0.0
        %848 = vmatprep.subr.mxu0 0.0
        %849 = vmatpush1.msra.mxu0 0.0
        %850 = vmatprep.subr.mxu0 0.0
        %851 = vmatpush1.msra.mxu0 0.0
        %852 = vmatprep.subr.mxu0 0.0
        %853 = vmatpush1.msra.mxu0 0.0
        %854 = vmatprep.subr.mxu0 0.0
        %855 = vmatpush1.msra.mxu0 0.0
        %856 = vmatprep.subr.mxu0 0.0
        %857 = vmatpush1.msra.mxu0 0.0
        %858 = vmatprep.subr.mxu0 0.0
        %859 = vmatpush1.msra.mxu0 0.0
        %860 = vmatprep.subr.mxu0 0.0
        %861 = vmatpush1.msra.mxu0 0.0
        %862 = vmatprep.subr.mxu0 0.0
        %863 = vmatpush1.msra.mxu0 0.0
        %864 = vmatprep.subr.mxu0 0.0
        %865 = vmatpush1.msra.mxu0 0.0
        %866 = vmatprep.subr.mxu0 0.0
        %867 = vmatpush1.msra.mxu0 0.0
        %868 = vmatprep.subr.mxu0 0.0
        %869 = vmatpush1.msra.mxu0 0.0
        %870 = vmatprep.subr.mxu0 0.0
        %871 = vmatpush1.msra.mxu0 0.0
        %872 = vmatprep.subr.mxu0 0.0
        %873 = vmatpush1.msra.mxu0 0.0
        %874 = vmatprep.subr.mxu0 0.0
        %875 = vmatpush1.msra.mxu0 0.0
        %876 = vmatprep.subr.mxu0 0.0
        %877 = vmatpush1.msra.mxu0 0.0
        %878 = vmatprep.subr.mxu0 0.0
        %879 = vmatpush1.msra.mxu0 0.0
        %880 = vmatprep.subr.mxu0 0.0
        %881 = vmatpush1.msra.mxu0 0.0
        %882 = vmatprep.subr.mxu0 0.0
        %883 = vmatpush1.msra.mxu0 0.0
        %884 = vmatprep.subr.mxu0 0.0
        %885 = vmatpush1.msra.mxu0 0.0
        %886 = vmatprep.mubr.f32.mxu0 0.0
        %v887 = vand.u32 %v267, 4294901760
        %888 = vmatmul.mubr.f32.gmra.mrb[0].mxu0 %v887
        %v889 = vpop.f32.mrb[0].mxu0
        %v890 = vadd.f32 %v808, %v889
        %v891 = vpop.f32.mrb[0].mxu0
        %v892 = vadd.f32 %v810, %v891
        %893 = vdwg.mxu0
        %v894 = vand.u32 %v261, 4294901760
        %v895 = vsub.f32 %v261, %v894
        %896 = vmatprep.subr.mxu0 %v895
        %v897 = vand.u32 %v260, 4294901760
        %v898 = vsub.f32 %v260, %v897
        %899 = vmatpush1.msra.mxu0 %v898
        %900 = vmatprep.subr.mxu0 0.0
        %901 = vmatpush1.msra.mxu0 0.0
        %902 = vmatprep.subr.mxu0 0.0
        %903 = vmatpush1.msra.mxu0 0.0
        %904 = vmatprep.subr.mxu0 0.0
        %905 = vmatpush1.msra.mxu0 0.0
        %906 = vmatprep.subr.mxu0 0.0
        %907 = vmatpush1.msra.mxu0 0.0
        %908 = vmatprep.subr.mxu0 0.0
        %909 = vmatpush1.msra.mxu0 0.0
        %910 = vmatprep.subr.mxu0 0.0
        %911 = vmatpush1.msra.mxu0 0.0
        %912 = vmatprep.subr.mxu0 0.0
        %913 = vmatpush1.msra.mxu0 0.0
        %914 = vmatprep.subr.mxu0 0.0
        %915 = vmatpush1.msra.mxu0 0.0
        %916 = vmatprep.subr.mxu0 0.0
        %917 = vmatpush1.msra.mxu0 0.0
        %918 = vmatprep.subr.mxu0 0.0
        %919 = vmatpush1.msra.mxu0 0.0
        %920 = vmatprep.subr.mxu0 0.0
        %921 = vmatpush1.msra.mxu0 0.0
        %922 = vmatprep.subr.mxu0 0.0
        %923 = vmatpush1.msra.mxu0 0.0
        %924 = vmatprep.subr.mxu0 0.0
        %925 = vmatpush1.msra.mxu0 0.0
        %926 = vmatprep.subr.mxu0 0.0
        %927 = vmatpush1.msra.mxu0 0.0
        %928 = vmatprep.subr.mxu0 0.0
        %929 = vmatpush1.msra.mxu0 0.0
        %930 = vmatprep.subr.mxu0 0.0
        %931 = vmatpush1.msra.mxu0 0.0
        %932 = vmatprep.subr.mxu0 0.0
        %933 = vmatpush1.msra.mxu0 0.0
        %934 = vmatprep.subr.mxu0 0.0
        %935 = vmatpush1.msra.mxu0 0.0
        %936 = vmatprep.subr.mxu0 0.0
        %937 = vmatpush1.msra.mxu0 0.0
        %938 = vmatprep.subr.mxu0 0.0
        %939 = vmatpush1.msra.mxu0 0.0
        %940 = vmatprep.subr.mxu0 0.0
        %941 = vmatpush1.msra.mxu0 0.0
        %942 = vmatprep.subr.mxu0 0.0
        %943 = vmatpush1.msra.mxu0 0.0
        %944 = vmatprep.subr.mxu0 0.0
        %945 = vmatpush1.msra.mxu0 0.0
        %946 = vmatprep.subr.mxu0 0.0
        %947 = vmatpush1.msra.mxu0 0.0
        %948 = vmatprep.subr.mxu0 0.0
        %949 = vmatpush1.msra.mxu0 0.0
        %950 = vmatprep.subr.mxu0 0.0
        %951 = vmatpush1.msra.mxu0 0.0
        %952 = vmatprep.subr.mxu0 0.0
        %953 = vmatpush1.msra.mxu0 0.0
        %954 = vmatprep.subr.mxu0 0.0
        %955 = vmatpush1.msra.mxu0 0.0
        %956 = vmatprep.subr.mxu0 0.0
        %957 = vmatpush1.msra.mxu0 0.0
        %958 = vmatprep.subr.mxu0 0.0
        %959 = vmatpush1.msra.mxu0 0.0
        %960 = vmatprep.subr.mxu0 0.0
        %961 = vmatpush1.msra.mxu0 0.0
        %962 = vmatprep.mubr.f32.mxu0 0.0
        %v963 = vand.u32 %v267, 4294901760
        %v964 = vsub.f32 %v267, %v963
        %965 = vmatmul.mubr.f32.gmra.mrb[0].mxu0 %v964
        %v966 = vpop.f32.mrb[0].mxu0
        %v967 = vadd.f32 %v890, %v966
        %v968 = vpop.f32.mrb[0].mxu0
        %v969 = vadd.f32 %v892, %v968
        %970 = vdwg.mxu0
        %v971 = vand.u32 %v261, 4294901760
        %972 = vmatprep.subr.mxu0 %v971
        %v973 = vand.u32 %v260, 4294901760
        %974 = vmatpush1.msra.mxu0 %v973
        %975 = vmatprep.subr.mxu0 0.0
        %976 = vmatpush1.msra.mxu0 0.0
        %977 = vmatprep.subr.mxu0 0.0
        %978 = vmatpush1.msra.mxu0 0.0
        %979 = vmatprep.subr.mxu0 0.0
        %980 = vmatpush1.msra.mxu0 0.0
        %981 = vmatprep.subr.mxu0 0.0
        %982 = vmatpush1.msra.mxu0 0.0
        %983 = vmatprep.subr.mxu0 0.0
        %984 = vmatpush1.msra.mxu0 0.0
        %985 = vmatprep.subr.mxu0 0.0
        %986 = vmatpush1.msra.mxu0 0.0
        %987 = vmatprep.subr.mxu0 0.0
        %988 = vmatpush1.msra.mxu0 0.0
        %989 = vmatprep.subr.mxu0 0.0
        %990 = vmatpush1.msra.mxu0 0.0
        %991 = vmatprep.subr.mxu0 0.0
        %992 = vmatpush1.msra.mxu0 0.0
        %993 = vmatprep.subr.mxu0 0.0
        %994 = vmatpush1.msra.mxu0 0.0
        %995 = vmatprep.subr.mxu0 0.0
        %996 = vmatpush1.msra.mxu0 0.0
        %997 = vmatprep.subr.mxu0 0.0
        %998 = vmatpush1.msra.mxu0 0.0
        %999 = vmatprep.subr.mxu0 0.0
        %1000 = vmatpush1.msra.mxu0 0.0
        %1001 = vmatprep.subr.mxu0 0.0
        %1002 = vmatpush1.msra.mxu0 0.0
        %1003 = vmatprep.subr.mxu0 0.0
        %1004 = vmatpush1.msra.mxu0 0.0
        %1005 = vmatprep.subr.mxu0 0.0
        %1006 = vmatpush1.msra.mxu0 0.0
        %1007 = vmatprep.subr.mxu0 0.0
        %1008 = vmatpush1.msra.mxu0 0.0
        %1009 = vmatprep.subr.mxu0 0.0
        %1010 = vmatpush1.msra.mxu0 0.0
        %1011 = vmatprep.subr.mxu0 0.0
        %1012 = vmatpush1.msra.mxu0 0.0
        %1013 = vmatprep.subr.mxu0 0.0
        %1014 = vmatpush1.msra.mxu0 0.0
        %1015 = vmatprep.subr.mxu0 0.0
        %1016 = vmatpush1.msra.mxu0 0.0
        %1017 = vmatprep.subr.mxu0 0.0
        %1018 = vmatpush1.msra.mxu0 0.0
        %1019 = vmatprep.subr.mxu0 0.0
        %1020 = vmatpush1.msra.mxu0 0.0
        %1021 = vmatprep.subr.mxu0 0.0
        %1022 = vmatpush1.msra.mxu0 0.0
        %1023 = vmatprep.subr.mxu0 0.0
        %1024 = vmatpush1.msra.mxu0 0.0
        %1025 = vmatprep.subr.mxu0 0.0
        %1026 = vmatpush1.msra.mxu0 0.0
        %1027 = vmatprep.subr.mxu0 0.0
        %1028 = vmatpush1.msra.mxu0 0.0
        %1029 = vmatprep.subr.mxu0 0.0
        %1030 = vmatpush1.msra.mxu0 0.0
        %1031 = vmatprep.subr.mxu0 0.0
        %1032 = vmatpush1.msra.mxu0 0.0
        %1033 = vmatprep.subr.mxu0 0.0
        %1034 = vmatpush1.msra.mxu0 0.0
        %1035 = vmatprep.subr.mxu0 0.0
        %1036 = vmatpush1.msra.mxu0 0.0
        %1037 = vmatprep.mubr.f32.mxu0 0.0
        %v1038 = vand.u32 %v267, 4294901760
        %v1039 = vsub.f32 %v267, %v1038
        %v1040 = vand.u32 %v1039, 4294901760
        %1041 = vmatmul.mubr.f32.gmra.mrb[0].mxu0 %v1040
        %v1042 = vpop.f32.mrb[0].mxu0
        %v1043 = vadd.f32 %v967, %v1042
        %v1044 = vpop.f32.mrb[0].mxu0
        %v1045 = vadd.f32 %v969, %v1044
        %1046 = vdwg.mxu0
        %v1047 = vand.u32 %v261, 4294901760
        %v1048 = vsub.f32 %v261, %v1047
        %v1049 = vand.u32 %v1048, 4294901760
        %1050 = vmatprep.subr.mxu0 %v1049
        %v1051 = vand.u32 %v260, 4294901760
        %v1052 = vsub.f32 %v260, %v1051
        %v1053 = vand.u32 %v1052, 4294901760
        %1054 = vmatpush1.msra.mxu0 %v1053
        %1055 = vmatprep.subr.mxu0 0.0
        %1056 = vmatpush1.msra.mxu0 0.0
        %1057 = vmatprep.subr.mxu0 0.0
        %1058 = vmatpush1.msra.mxu0 0.0
        %1059 = vmatprep.subr.mxu0 0.0
        %1060 = vmatpush1.msra.mxu0 0.0
        %1061 = vmatprep.subr.mxu0 0.0
        %1062 = vmatpush1.msra.mxu0 0.0
        %1063 = vmatprep.subr.mxu0 0.0
        %1064 = vmatpush1.msra.mxu0 0.0
        %1065 = vmatprep.subr.mxu0 0.0
        %1066 = vmatpush1.msra.mxu0 0.0
        %1067 = vmatprep.subr.mxu0 0.0
        %1068 = vmatpush1.msra.mxu0 0.0
        %1069 = vmatprep.subr.mxu0 0.0
        %1070 = vmatpush1.msra.mxu0 0.0
        %1071 = vmatprep.subr.mxu0 0.0
        %1072 = vmatpush1.msra.mxu0 0.0
        %1073 = vmatprep.subr.mxu0 0.0
        %1074 = vmatpush1.msra.mxu0 0.0
        %1075 = vmatprep.subr.mxu0 0.0
        %1076 = vmatpush1.msra.mxu0 0.0
        %1077 = vmatprep.subr.mxu0 0.0
        %1078 = vmatpush1.msra.mxu0 0.0
        %1079 = vmatprep.subr.mxu0 0.0
        %1080 = vmatpush1.msra.mxu0 0.0
        %1081 = vmatprep.subr.mxu0 0.0
        %1082 = vmatpush1.msra.mxu0 0.0
        %1083 = vmatprep.subr.mxu0 0.0
        %1084 = vmatpush1.msra.mxu0 0.0
        %1085 = vmatprep.subr.mxu0 0.0
        %1086 = vmatpush1.msra.mxu0 0.0
        %1087 = vmatprep.subr.mxu0 0.0
        %1088 = vmatpush1.msra.mxu0 0.0
        %1089 = vmatprep.subr.mxu0 0.0
        %1090 = vmatpush1.msra.mxu0 0.0
        %1091 = vmatprep.subr.mxu0 0.0
        %1092 = vmatpush1.msra.mxu0 0.0
        %1093 = vmatprep.subr.mxu0 0.0
        %1094 = vmatpush1.msra.mxu0 0.0
        %1095 = vmatprep.subr.mxu0 0.0
        %1096 = vmatpush1.msra.mxu0 0.0
        %1097 = vmatprep.subr.mxu0 0.0
        %1098 = vmatpush1.msra.mxu0 0.0
        %1099 = vmatprep.subr.mxu0 0.0
        %1100 = vmatpush1.msra.mxu0 0.0
        %1101 = vmatprep.subr.mxu0 0.0
        %1102 = vmatpush1.msra.mxu0 0.0
        %1103 = vmatprep.subr.mxu0 0.0
        %1104 = vmatpush1.msra.mxu0 0.0
        %1105 = vmatprep.subr.mxu0 0.0
        %1106 = vmatpush1.msra.mxu0 0.0
        %1107 = vmatprep.subr.mxu0 0.0
        %1108 = vmatpush1.msra.mxu0 0.0
        %1109 = vmatprep.subr.mxu0 0.0
        %1110 = vmatpush1.msra.mxu0 0.0
        %1111 = vmatprep.subr.mxu0 0.0
        %1112 = vmatpush1.msra.mxu0 0.0
        %1113 = vmatprep.subr.mxu0 0.0
        %1114 = vmatpush1.msra.mxu0 0.0
        %1115 = vmatprep.subr.mxu0 0.0
        %1116 = vmatpush1.msra.mxu0 0.0
        %1117 = vmatprep.mubr.f32.mxu0 0.0
        %v1118 = vand.u32 %v267, 4294901760
        %1119 = vmatmul.mubr.f32.gmra.mrb[0].mxu0 %v1118
        %v1120 = vpop.f32.mrb[0].mxu0
        %v1121 = vadd.f32 %v1043, %v1120
        %v1122 = vpop.f32.mrb[0].mxu0
        %v1123 = vadd.f32 %v1045, %v1122
        %1124 = vdwg.mxu0
        %v1125 = vand.u32 %v261, 4294901760
        %1126 = vmatprep.subr.mxu0 %v1125
        %v1127 = vand.u32 %v260, 4294901760
        %1128 = vmatpush1.msra.mxu0 %v1127
        %1129 = vmatprep.subr.mxu0 0.0
        %1130 = vmatpush1.msra.mxu0 0.0
        %1131 = vmatprep.subr.mxu0 0.0
        %1132 = vmatpush1.msra.mxu0 0.0
        %1133 = vmatprep.subr.mxu0 0.0
        %1134 = vmatpush1.msra.mxu0 0.0
        %1135 = vmatprep.subr.mxu0 0.0
        %1136 = vmatpush1.msra.mxu0 0.0
        %1137 = vmatprep.subr.mxu0 0.0
        %1138 = vmatpush1.msra.mxu0 0.0
        %1139 = vmatprep.subr.mxu0 0.0
        %1140 = vmatpush1.msra.mxu0 0.0
        %1141 = vmatprep.subr.mxu0 0.0
        %1142 = vmatpush1.msra.mxu0 0.0
        %1143 = vmatprep.subr.mxu0 0.0
        %1144 = vmatpush1.msra.mxu0 0.0
        %1145 = vmatprep.subr.mxu0 0.0
        %1146 = vmatpush1.msra.mxu0 0.0
        %1147 = vmatprep.subr.mxu0 0.0
        %1148 = vmatpush1.msra.mxu0 0.0
        %1149 = vmatprep.subr.mxu0 0.0
        %1150 = vmatpush1.msra.mxu0 0.0
        %1151 = vmatprep.subr.mxu0 0.0
        %1152 = vmatpush1.msra.mxu0 0.0
        %1153 = vmatprep.subr.mxu0 0.0
        %1154 = vmatpush1.msra.mxu0 0.0
        %1155 = vmatprep.subr.mxu0 0.0
        %1156 = vmatpush1.msra.mxu0 0.0
        %1157 = vmatprep.subr.mxu0 0.0
        %1158 = vmatpush1.msra.mxu0 0.0
        %1159 = vmatprep.subr.mxu0 0.0
        %1160 = vmatpush1.msra.mxu0 0.0
        %1161 = vmatprep.subr.mxu0 0.0
        %1162 = vmatpush1.msra.mxu0 0.0
        %1163 = vmatprep.subr.mxu0 0.0
        %1164 = vmatpush1.msra.mxu0 0.0
        %1165 = vmatprep.subr.mxu0 0.0
        %1166 = vmatpush1.msra.mxu0 0.0
        %1167 = vmatprep.subr.mxu0 0.0
        %1168 = vmatpush1.msra.mxu0 0.0
        %1169 = vmatprep.subr.mxu0 0.0
        %1170 = vmatpush1.msra.mxu0 0.0
        %1171 = vmatprep.subr.mxu0 0.0
        %1172 = vmatpush1.msra.mxu0 0.0
        %1173 = vmatprep.subr.mxu0 0.0
        %1174 = vmatpush1.msra.mxu0 0.0
        %1175 = vmatprep.subr.mxu0 0.0
        %1176 = vmatpush1.msra.mxu0 0.0
        %1177 = vmatprep.subr.mxu0 0.0
        %1178 = vmatpush1.msra.mxu0 0.0
        %1179 = vmatprep.subr.mxu0 0.0
        %1180 = vmatpush1.msra.mxu0 0.0
        %1181 = vmatprep.subr.mxu0 0.0
        %1182 = vmatpush1.msra.mxu0 0.0
        %1183 = vmatprep.subr.mxu0 0.0
        %1184 = vmatpush1.msra.mxu0 0.0
        %1185 = vmatprep.subr.mxu0 0.0
        %1186 = vmatpush1.msra.mxu0 0.0
        %1187 = vmatprep.subr.mxu0 0.0
        %1188 = vmatpush1.msra.mxu0 0.0
        %1189 = vmatprep.subr.mxu0 0.0
        %1190 = vmatpush1.msra.mxu0 0.0
        %1191 = vmatprep.mubr.f32.mxu0 0.0
        %v1192 = vand.u32 %v267, 4294901760
        %1193 = vmatmul.mubr.f32.gmra.mrb[0].mxu0 %v1192
        %v1194 = vpop.f32.mrb[0].mxu0
        %v1195 = vadd.f32 %v1121, %v1194
        %v1196 = vpop.f32.mrb[0].mxu0
        %v1197 = vadd.f32 %v1123, %v1196
        %1198 = vdwg.mxu0
        %v1199 = vand.u32 %v263, 4294901760
        %1200 = vmatprep.subr.mxu0 %v1199
        %v1201 = vand.u32 %v262, 4294901760
        %1202 = vmatpush1.msra.mxu0 %v1201
        %1203 = vmatprep.subr.mxu0 0.0
        %1204 = vmatpush1.msra.mxu0 0.0
        %1205 = vmatprep.subr.mxu0 0.0
        %1206 = vmatpush1.msra.mxu0 0.0
        %1207 = vmatprep.subr.mxu0 0.0
        %1208 = vmatpush1.msra.mxu0 0.0
        %1209 = vmatprep.subr.mxu0 0.0
        %1210 = vmatpush1.msra.mxu0 0.0
        %1211 = vmatprep.subr.mxu0 0.0
        %1212 = vmatpush1.msra.mxu0 0.0
        %1213 = vmatprep.subr.mxu0 0.0
        %1214 = vmatpush1.msra.mxu0 0.0
        %1215 = vmatprep.subr.mxu0 0.0
        %1216 = vmatpush1.msra.mxu0 0.0
        %1217 = vmatprep.subr.mxu0 0.0
        %1218 = vmatpush1.msra.mxu0 0.0
        %1219 = vmatprep.subr.mxu0 0.0
        %1220 = vmatpush1.msra.mxu0 0.0
        %1221 = vmatprep.subr.mxu0 0.0
        %1222 = vmatpush1.msra.mxu0 0.0
        %1223 = vmatprep.subr.mxu0 0.0
        %1224 = vmatpush1.msra.mxu0 0.0
        %1225 = vmatprep.subr.mxu0 0.0
        %1226 = vmatpush1.msra.mxu0 0.0
        %1227 = vmatprep.subr.mxu0 0.0
        %1228 = vmatpush1.msra.mxu0 0.0
        %1229 = vmatprep.subr.mxu0 0.0
        %1230 = vmatpush1.msra.mxu0 0.0
        %1231 = vmatprep.subr.mxu0 0.0
        %1232 = vmatpush1.msra.mxu0 0.0
        %1233 = vmatprep.subr.mxu0 0.0
        %1234 = vmatpush1.msra.mxu0 0.0
        %1235 = vmatprep.subr.mxu0 0.0
        %1236 = vmatpush1.msra.mxu0 0.0
        %1237 = vmatprep.subr.mxu0 0.0
        %1238 = vmatpush1.msra.mxu0 0.0
        %1239 = vmatprep.subr.mxu0 0.0
        %1240 = vmatpush1.msra.mxu0 0.0
        %1241 = vmatprep.subr.mxu0 0.0
        %1242 = vmatpush1.msra.mxu0 0.0
        %1243 = vmatprep.subr.mxu0 0.0
        %1244 = vmatpush1.msra.mxu0 0.0
        %1245 = vmatprep.subr.mxu0 0.0
        %1246 = vmatpush1.msra.mxu0 0.0
        %1247 = vmatprep.subr.mxu0 0.0
        %1248 = vmatpush1.msra.mxu0 0.0
        %1249 = vmatprep.subr.mxu0 0.0
        %1250 = vmatpush1.msra.mxu0 0.0
        %1251 = vmatprep.subr.mxu0 0.0
        %1252 = vmatpush1.msra.mxu0 0.0
        %1253 = vmatprep.subr.mxu0 0.0
        %1254 = vmatpush1.msra.mxu0 0.0
        %1255 = vmatprep.subr.mxu0 0.0
        %1256 = vmatpush1.msra.mxu0 0.0
        %1257 = vmatprep.subr.mxu0 0.0
        %1258 = vmatpush1.msra.mxu0 0.0
        %1259 = vmatprep.subr.mxu0 0.0
        %1260 = vmatpush1.msra.mxu0 0.0
        %1261 = vmatprep.subr.mxu0 0.0
        %1262 = vmatpush1.msra.mxu0 0.0
        %1263 = vmatprep.subr.mxu0 0.0
        %1264 = vmatpush1.msra.mxu0 0.0
        %1265 = vmatprep.mubr.f32.mxu0 0.0
        %v1266 = vand.u32 %v267, 4294901760
        %v1267 = vsub.f32 %v267, %v1266
        %v1268 = vand.u32 %v1267, 4294901760
        %v1269 = vsub.f32 %v1267, %v1268
        %v1270 = vand.u32 %v1269, 4294901760
        %1271 = vmatmul.mubr.f32.gmra.mrb[0].mxu0 %v1270
        %v1272 = vpop.f32.mrb[0].mxu0
        %v1273 = vadd.f32 0.0, %v1272
        %v1274 = vpop.f32.mrb[0].mxu0
        %v1275 = vadd.f32 0.0, %v1274
        %1276 = vdwg.mxu0
        %v1277 = vand.u32 %v263, 4294901760
        %v1278 = vsub.f32 %v263, %v1277
        %v1279 = vand.u32 %v1278, 4294901760
        %v1280 = vsub.f32 %v1278, %v1279
        %v1281 = vand.u32 %v1280, 4294901760
        %1282 = vmatprep.subr.mxu0 %v1281
        %v1283 = vand.u32 %v262, 4294901760
        %v1284 = vsub.f32 %v262, %v1283
        %v1285 = vand.u32 %v1284, 4294901760
        %v1286 = vsub.f32 %v1284, %v1285
        %v1287 = vand.u32 %v1286, 4294901760
        %1288 = vmatpush1.msra.mxu0 %v1287
        %1289 = vmatprep.subr.mxu0 0.0
        %1290 = vmatpush1.msra.mxu0 0.0
        %1291 = vmatprep.subr.mxu0 0.0
        %1292 = vmatpush1.msra.mxu0 0.0
        %1293 = vmatprep.subr.mxu0 0.0
        %1294 = vmatpush1.msra.mxu0 0.0
        %1295 = vmatprep.subr.mxu0 0.0
        %1296 = vmatpush1.msra.mxu0 0.0
        %1297 = vmatprep.subr.mxu0 0.0
        %1298 = vmatpush1.msra.mxu0 0.0
        %1299 = vmatprep.subr.mxu0 0.0
        %1300 = vmatpush1.msra.mxu0 0.0
        %1301 = vmatprep.subr.mxu0 0.0
        %1302 = vmatpush1.msra.mxu0 0.0
        %1303 = vmatprep.subr.mxu0 0.0
        %1304 = vmatpush1.msra.mxu0 0.0
        %1305 = vmatprep.subr.mxu0 0.0
        %1306 = vmatpush1.msra.mxu0 0.0
        %1307 = vmatprep.subr.mxu0 0.0
        %1308 = vmatpush1.msra.mxu0 0.0
        %1309 = vmatprep.subr.mxu0 0.0
        %1310 = vmatpush1.msra.mxu0 0.0
        %1311 = vmatprep.subr.mxu0 0.0
        %1312 = vmatpush1.msra.mxu0 0.0
        %1313 = vmatprep.subr.mxu0 0.0
        %1314 = vmatpush1.msra.mxu0 0.0
        %1315 = vmatprep.subr.mxu0 0.0
        %1316 = vmatpush1.msra.mxu0 0.0
        %1317 = vmatprep.subr.mxu0 0.0
        %1318 = vmatpush1.msra.mxu0 0.0
        %1319 = vmatprep.subr.mxu0 0.0
        %1320 = vmatpush1.msra.mxu0 0.0
        %1321 = vmatprep.subr.mxu0 0.0
        %1322 = vmatpush1.msra.mxu0 0.0
        %1323 = vmatprep.subr.mxu0 0.0
        %1324 = vmatpush1.msra.mxu0 0.0
        %1325 = vmatprep.subr.mxu0 0.0
        %1326 = vmatpush1.msra.mxu0 0.0
        %1327 = vmatprep.subr.mxu0 0.0
        %1328 = vmatpush1.msra.mxu0 0.0
        %1329 = vmatprep.subr.mxu0 0.0
        %1330 = vmatpush1.msra.mxu0 0.0
        %1331 = vmatprep.subr.mxu0 0.0
        %1332 = vmatpush1.msra.mxu0 0.0
        %1333 = vmatprep.subr.mxu0 0.0
        %1334 = vmatpush1.msra.mxu0 0.0
        %1335 = vmatprep.subr.mxu0 0.0
        %1336 = vmatpush1.msra.mxu0 0.0
        %1337 = vmatprep.subr.mxu0 0.0
        %1338 = vmatpush1.msra.mxu0 0.0
        %1339 = vmatprep.subr.mxu0 0.0
        %1340 = vmatpush1.msra.mxu0 0.0
        %1341 = vmatprep.subr.mxu0 0.0
        %1342 = vmatpush1.msra.mxu0 0.0
        %1343 = vmatprep.subr.mxu0 0.0
        %1344 = vmatpush1.msra.mxu0 0.0
        %1345 = vmatprep.subr.mxu0 0.0
        %1346 = vmatpush1.msra.mxu0 0.0
        %1347 = vmatprep.subr.mxu0 0.0
        %1348 = vmatpush1.msra.mxu0 0.0
        %1349 = vmatprep.subr.mxu0 0.0
        %1350 = vmatpush1.msra.mxu0 0.0
        %1351 = vmatprep.mubr.f32.mxu0 0.0
        %v1352 = vand.u32 %v267, 4294901760
        %1353 = vmatmul.mubr.f32.gmra.mrb[0].mxu0 %v1352
        %v1354 = vpop.f32.mrb[0].mxu0
        %v1355 = vadd.f32 %v1273, %v1354
        %v1356 = vpop.f32.mrb[0].mxu0
        %v1357 = vadd.f32 %v1275, %v1356
        %1358 = vdwg.mxu0
        %v1359 = vand.u32 %v263, 4294901760
        %v1360 = vsub.f32 %v263, %v1359
        %1361 = vmatprep.subr.mxu0 %v1360
        %v1362 = vand.u32 %v262, 4294901760
        %v1363 = vsub.f32 %v262, %v1362
        %1364 = vmatpush1.msra.mxu0 %v1363
        %1365 = vmatprep.subr.mxu0 0.0
        %1366 = vmatpush1.msra.mxu0 0.0
        %1367 = vmatprep.subr.mxu0 0.0
        %1368 = vmatpush1.msra.mxu0 0.0
        %1369 = vmatprep.subr.mxu0 0.0
        %1370 = vmatpush1.msra.mxu0 0.0
        %1371 = vmatprep.subr.mxu0 0.0
        %1372 = vmatpush1.msra.mxu0 0.0
        %1373 = vmatprep.subr.mxu0 0.0
        %1374 = vmatpush1.msra.mxu0 0.0
        %1375 = vmatprep.subr.mxu0 0.0
        %1376 = vmatpush1.msra.mxu0 0.0
        %1377 = vmatprep.subr.mxu0 0.0
        %1378 = vmatpush1.msra.mxu0 0.0
        %1379 = vmatprep.subr.mxu0 0.0
        %1380 = vmatpush1.msra.mxu0 0.0
        %1381 = vmatprep.subr.mxu0 0.0
        %1382 = vmatpush1.msra.mxu0 0.0
        %1383 = vmatprep.subr.mxu0 0.0
        %1384 = vmatpush1.msra.mxu0 0.0
        %1385 = vmatprep.subr.mxu0 0.0
        %1386 = vmatpush1.msra.mxu0 0.0
        %1387 = vmatprep.subr.mxu0 0.0
        %1388 = vmatpush1.msra.mxu0 0.0
        %1389 = vmatprep.subr.mxu0 0.0
        %1390 = vmatpush1.msra.mxu0 0.0
        %1391 = vmatprep.subr.mxu0 0.0
        %1392 = vmatpush1.msra.mxu0 0.0
        %1393 = vmatprep.subr.mxu0 0.0
        %1394 = vmatpush1.msra.mxu0 0.0
        %1395 = vmatprep.subr.mxu0 0.0
        %1396 = vmatpush1.msra.mxu0 0.0
        %1397 = vmatprep.subr.mxu0 0.0
        %1398 = vmatpush1.msra.mxu0 0.0
        %1399 = vmatprep.subr.mxu0 0.0
        %1400 = vmatpush1.msra.mxu0 0.0
        %1401 = vmatprep.subr.mxu0 0.0
        %1402 = vmatpush1.msra.mxu0 0.0
        %1403 = vmatprep.subr.mxu0 0.0
        %1404 = vmatpush1.msra.mxu0 0.0
        %1405 = vmatprep.subr.mxu0 0.0
        %1406 = vmatpush1.msra.mxu0 0.0
        %1407 = vmatprep.subr.mxu0 0.0
        %1408 = vmatpush1.msra.mxu0 0.0
        %1409 = vmatprep.subr.mxu0 0.0
        %1410 = vmatpush1.msra.mxu0 0.0
        %1411 = vmatprep.subr.mxu0 0.0
        %1412 = vmatpush1.msra.mxu0 0.0
        %1413 = vmatprep.subr.mxu0 0.0
        %1414 = vmatpush1.msra.mxu0 0.0
        %1415 = vmatprep.subr.mxu0 0.0
        %1416 = vmatpush1.msra.mxu0 0.0
        %1417 = vmatprep.subr.mxu0 0.0
        %1418 = vmatpush1.msra.mxu0 0.0
        %1419 = vmatprep.subr.mxu0 0.0
        %1420 = vmatpush1.msra.mxu0 0.0
        %1421 = vmatprep.subr.mxu0 0.0
        %1422 = vmatpush1.msra.mxu0 0.0
        %1423 = vmatprep.subr.mxu0 0.0
        %1424 = vmatpush1.msra.mxu0 0.0
        %1425 = vmatprep.subr.mxu0 0.0
        %1426 = vmatpush1.msra.mxu0 0.0
        %1427 = vmatprep.mubr.f32.mxu0 0.0
        %v1428 = vand.u32 %v267, 4294901760
        %v1429 = vsub.f32 %v267, %v1428
        %1430 = vmatmul.mubr.f32.gmra.mrb[0].mxu0 %v1429
        %v1431 = vpop.f32.mrb[0].mxu0
        %v1432 = vadd.f32 %v1355, %v1431
        %v1433 = vpop.f32.mrb[0].mxu0
        %v1434 = vadd.f32 %v1357, %v1433
        %1435 = vdwg.mxu0
        %v1436 = vand.u32 %v263, 4294901760
        %1437 = vmatprep.subr.mxu0 %v1436
        %v1438 = vand.u32 %v262, 4294901760
        %1439 = vmatpush1.msra.mxu0 %v1438
        %1440 = vmatprep.subr.mxu0 0.0
        %1441 = vmatpush1.msra.mxu0 0.0
        %1442 = vmatprep.subr.mxu0 0.0
        %1443 = vmatpush1.msra.mxu0 0.0
        %1444 = vmatprep.subr.mxu0 0.0
        %1445 = vmatpush1.msra.mxu0 0.0
        %1446 = vmatprep.subr.mxu0 0.0
        %1447 = vmatpush1.msra.mxu0 0.0
        %1448 = vmatprep.subr.mxu0 0.0
        %1449 = vmatpush1.msra.mxu0 0.0
        %1450 = vmatprep.subr.mxu0 0.0
        %1451 = vmatpush1.msra.mxu0 0.0
        %1452 = vmatprep.subr.mxu0 0.0
        %1453 = vmatpush1.msra.mxu0 0.0
        %1454 = vmatprep.subr.mxu0 0.0
        %1455 = vmatpush1.msra.mxu0 0.0
        %1456 = vmatprep.subr.mxu0 0.0
        %1457 = vmatpush1.msra.mxu0 0.0
        %1458 = vmatprep.subr.mxu0 0.0
        %1459 = vmatpush1.msra.mxu0 0.0
        %1460 = vmatprep.subr.mxu0 0.0
        %1461 = vmatpush1.msra.mxu0 0.0
        %1462 = vmatprep.subr.mxu0 0.0
        %1463 = vmatpush1.msra.mxu0 0.0
        %1464 = vmatprep.subr.mxu0 0.0
        %1465 = vmatpush1.msra.mxu0 0.0
        %1466 = vmatprep.subr.mxu0 0.0
        %1467 = vmatpush1.msra.mxu0 0.0
        %1468 = vmatprep.subr.mxu0 0.0
        %1469 = vmatpush1.msra.mxu0 0.0
        %1470 = vmatprep.subr.mxu0 0.0
        %1471 = vmatpush1.msra.mxu0 0.0
        %1472 = vmatprep.subr.mxu0 0.0
        %1473 = vmatpush1.msra.mxu0 0.0
        %1474 = vmatprep.subr.mxu0 0.0
        %1475 = vmatpush1.msra.mxu0 0.0
        %1476 = vmatprep.subr.mxu0 0.0
        %1477 = vmatpush1.msra.mxu0 0.0
        %1478 = vmatprep.subr.mxu0 0.0
        %1479 = vmatpush1.msra.mxu0 0.0
        %1480 = vmatprep.subr.mxu0 0.0
        %1481 = vmatpush1.msra.mxu0 0.0
        %1482 = vmatprep.subr.mxu0 0.0
        %1483 = vmatpush1.msra.mxu0 0.0
        %1484 = vmatprep.subr.mxu0 0.0
        %1485 = vmatpush1.msra.mxu0 0.0
        %1486 = vmatprep.subr.mxu0 0.0
        %1487 = vmatpush1.msra.mxu0 0.0
        %1488 = vmatprep.subr.mxu0 0.0
        %1489 = vmatpush1.msra.mxu0 0.0
        %1490 = vmatprep.subr.mxu0 0.0
        %1491 = vmatpush1.msra.mxu0 0.0
        %1492 = vmatprep.subr.mxu0 0.0
        %1493 = vmatpush1.msra.mxu0 0.0
        %1494 = vmatprep.subr.mxu0 0.0
        %1495 = vmatpush1.msra.mxu0 0.0
        %1496 = vmatprep.subr.mxu0 0.0
        %1497 = vmatpush1.msra.mxu0 0.0
        %1498 = vmatprep.subr.mxu0 0.0
        %1499 = vmatpush1.msra.mxu0 0.0
        %1500 = vmatprep.subr.mxu0 0.0
        %1501 = vmatpush1.msra.mxu0 0.0
        %1502 = vmatprep.mubr.f32.mxu0 0.0
        %v1503 = vand.u32 %v267, 4294901760
        %v1504 = vsub.f32 %v267, %v1503
        %v1505 = vand.u32 %v1504, 4294901760
        %1506 = vmatmul.mubr.f32.gmra.mrb[0].mxu0 %v1505
        %v1507 = vpop.f32.mrb[0].mxu0
        %v1508 = vadd.f32 %v1432, %v1507
        %v1509 = vpop.f32.mrb[0].mxu0
        %v1510 = vadd.f32 %v1434, %v1509
        %1511 = vdwg.mxu0
        %v1512 = vand.u32 %v263, 4294901760
        %v1513 = vsub.f32 %v263, %v1512
        %v1514 = vand.u32 %v1513, 4294901760
        %1515 = vmatprep.subr.mxu0 %v1514
        %v1516 = vand.u32 %v262, 4294901760
        %v1517 = vsub.f32 %v262, %v1516
        %v1518 = vand.u32 %v1517, 4294901760
        %1519 = vmatpush1.msra.mxu0 %v1518
        %1520 = vmatprep.subr.mxu0 0.0
        %1521 = vmatpush1.msra.mxu0 0.0
        %1522 = vmatprep.subr.mxu0 0.0
        %1523 = vmatpush1.msra.mxu0 0.0
        %1524 = vmatprep.subr.mxu0 0.0
        %1525 = vmatpush1.msra.mxu0 0.0
        %1526 = vmatprep.subr.mxu0 0.0
        %1527 = vmatpush1.msra.mxu0 0.0
        %1528 = vmatprep.subr.mxu0 0.0
        %1529 = vmatpush1.msra.mxu0 0.0
        %1530 = vmatprep.subr.mxu0 0.0
        %1531 = vmatpush1.msra.mxu0 0.0
        %1532 = vmatprep.subr.mxu0 0.0
        %1533 = vmatpush1.msra.mxu0 0.0
        %1534 = vmatprep.subr.mxu0 0.0
        %1535 = vmatpush1.msra.mxu0 0.0
        %1536 = vmatprep.subr.mxu0 0.0
        %1537 = vmatpush1.msra.mxu0 0.0
        %1538 = vmatprep.subr.mxu0 0.0
        %1539 = vmatpush1.msra.mxu0 0.0
        %1540 = vmatprep.subr.mxu0 0.0
        %1541 = vmatpush1.msra.mxu0 0.0
        %1542 = vmatprep.subr.mxu0 0.0
        %1543 = vmatpush1.msra.mxu0 0.0
        %1544 = vmatprep.subr.mxu0 0.0
        %1545 = vmatpush1.msra.mxu0 0.0
        %1546 = vmatprep.subr.mxu0 0.0
        %1547 = vmatpush1.msra.mxu0 0.0
        %1548 = vmatprep.subr.mxu0 0.0
        %1549 = vmatpush1.msra.mxu0 0.0
        %1550 = vmatprep.subr.mxu0 0.0
        %1551 = vmatpush1.msra.mxu0 0.0
        %1552 = vmatprep.subr.mxu0 0.0
        %1553 = vmatpush1.msra.mxu0 0.0
        %1554 = vmatprep.subr.mxu0 0.0
        %1555 = vmatpush1.msra.mxu0 0.0
        %1556 = vmatprep.subr.mxu0 0.0
        %1557 = vmatpush1.msra.mxu0 0.0
        %1558 = vmatprep.subr.mxu0 0.0
        %1559 = vmatpush1.msra.mxu0 0.0
        %1560 = vmatprep.subr.mxu0 0.0
        %1561 = vmatpush1.msra.mxu0 0.0
        %1562 = vmatprep.subr.mxu0 0.0
        %1563 = vmatpush1.msra.mxu0 0.0
        %1564 = vmatprep.subr.mxu0 0.0
        %1565 = vmatpush1.msra.mxu0 0.0
        %1566 = vmatprep.subr.mxu0 0.0
        %1567 = vmatpush1.msra.mxu0 0.0
        %1568 = vmatprep.subr.mxu0 0.0
        %1569 = vmatpush1.msra.mxu0 0.0
        %1570 = vmatprep.subr.mxu0 0.0
        %1571 = vmatpush1.msra.mxu0 0.0
        %1572 = vmatprep.subr.mxu0 0.0
        %1573 = vmatpush1.msra.mxu0 0.0
        %1574 = vmatprep.subr.mxu0 0.0
        %1575 = vmatpush1.msra.mxu0 0.0
        %1576 = vmatprep.subr.mxu0 0.0
        %1577 = vmatpush1.msra.mxu0 0.0
        %1578 = vmatprep.subr.mxu0 0.0
        %1579 = vmatpush1.msra.mxu0 0.0
        %1580 = vmatprep.subr.mxu0 0.0
        %1581 = vmatpush1.msra.mxu0 0.0
        %1582 = vmatprep.mubr.f32.mxu0 0.0
        %v1583 = vand.u32 %v267, 4294901760
        %1584 = vmatmul.mubr.f32.gmra.mrb[0].mxu0 %v1583
        %v1585 = vpop.f32.mrb[0].mxu0
        %v1586 = vadd.f32 %v1508, %v1585
        %v1587 = vpop.f32.mrb[0].mxu0
        %v1588 = vadd.f32 %v1510, %v1587
        %1589 = vdwg.mxu0
        %v1590 = vand.u32 %v263, 4294901760
        %1591 = vmatprep.subr.mxu0 %v1590
        %v1592 = vand.u32 %v262, 4294901760
        %1593 = vmatpush1.msra.mxu0 %v1592
        %1594 = vmatprep.subr.mxu0 0.0
        %1595 = vmatpush1.msra.mxu0 0.0
        %1596 = vmatprep.subr.mxu0 0.0
        %1597 = vmatpush1.msra.mxu0 0.0
        %1598 = vmatprep.subr.mxu0 0.0
        %1599 = vmatpush1.msra.mxu0 0.0
        %1600 = vmatprep.subr.mxu0 0.0
        %1601 = vmatpush1.msra.mxu0 0.0
        %1602 = vmatprep.subr.mxu0 0.0
        %1603 = vmatpush1.msra.mxu0 0.0
        %1604 = vmatprep.subr.mxu0 0.0
        %1605 = vmatpush1.msra.mxu0 0.0
        %1606 = vmatprep.subr.mxu0 0.0
        %1607 = vmatpush1.msra.mxu0 0.0
        %1608 = vmatprep.subr.mxu0 0.0
        %1609 = vmatpush1.msra.mxu0 0.0
        %1610 = vmatprep.subr.mxu0 0.0
        %1611 = vmatpush1.msra.mxu0 0.0
        %1612 = vmatprep.subr.mxu0 0.0
        %1613 = vmatpush1.msra.mxu0 0.0
        %1614 = vmatprep.subr.mxu0 0.0
        %1615 = vmatpush1.msra.mxu0 0.0
        %1616 = vmatprep.subr.mxu0 0.0
        %1617 = vmatpush1.msra.mxu0 0.0
        %1618 = vmatprep.subr.mxu0 0.0
        %1619 = vmatpush1.msra.mxu0 0.0
        %1620 = vmatprep.subr.mxu0 0.0
        %1621 = vmatpush1.msra.mxu0 0.0
        %1622 = vmatprep.subr.mxu0 0.0
        %1623 = vmatpush1.msra.mxu0 0.0
        %1624 = vmatprep.subr.mxu0 0.0
        %1625 = vmatpush1.msra.mxu0 0.0
        %1626 = vmatprep.subr.mxu0 0.0
        %1627 = vmatpush1.msra.mxu0 0.0
        %1628 = vmatprep.subr.mxu0 0.0
        %1629 = vmatpush1.msra.mxu0 0.0
        %1630 = vmatprep.subr.mxu0 0.0
        %1631 = vmatpush1.msra.mxu0 0.0
        %1632 = vmatprep.subr.mxu0 0.0
        %1633 = vmatpush1.msra.mxu0 0.0
        %1634 = vmatprep.subr.mxu0 0.0
        %1635 = vmatpush1.msra.mxu0 0.0
        %1636 = vmatprep.subr.mxu0 0.0
        %1637 = vmatpush1.msra.mxu0 0.0
        %1638 = vmatprep.subr.mxu0 0.0
        %1639 = vmatpush1.msra.mxu0 0.0
        %1640 = vmatprep.subr.mxu0 0.0
        %1641 = vmatpush1.msra.mxu0 0.0
        %1642 = vmatprep.subr.mxu0 0.0
        %1643 = vmatpush1.msra.mxu0 0.0
        %1644 = vmatprep.subr.mxu0 0.0
        %1645 = vmatpush1.msra.mxu0 0.0
        %1646 = vmatprep.subr.mxu0 0.0
        %1647 = vmatpush1.msra.mxu0 0.0
        %1648 = vmatprep.subr.mxu0 0.0
        %1649 = vmatpush1.msra.mxu0 0.0
        %1650 = vmatprep.subr.mxu0 0.0
        %1651 = vmatpush1.msra.mxu0 0.0
        %1652 = vmatprep.subr.mxu0 0.0
        %1653 = vmatpush1.msra.mxu0 0.0
        %1654 = vmatprep.subr.mxu0 0.0
        %1655 = vmatpush1.msra.mxu0 0.0
        %1656 = vmatprep.mubr.f32.mxu0 0.0
        %v1657 = vand.u32 %v267, 4294901760
        %1658 = vmatmul.mubr.f32.gmra.mrb[0].mxu0 %v1657
        %v1659 = vpop.f32.mrb[0].mxu0
        %v1660 = vadd.f32 %v1586, %v1659
        %v1661 = vpop.f32.mrb[0].mxu0
        %v1662 = vadd.f32 %v1588, %v1661
        %1663 = vdwg.mxu0
        %v1664 = vand.u32 %v265, 4294901760
        %1665 = vmatprep.subr.mxu0 %v1664
        %v1666 = vand.u32 %v264, 4294901760
        %1667 = vmatpush1.msra.mxu0 %v1666
        %1668 = vmatprep.subr.mxu0 0.0
        %1669 = vmatpush1.msra.mxu0 0.0
        %1670 = vmatprep.subr.mxu0 0.0
        %1671 = vmatpush1.msra.mxu0 0.0
        %1672 = vmatprep.subr.mxu0 0.0
        %1673 = vmatpush1.msra.mxu0 0.0
        %1674 = vmatprep.subr.mxu0 0.0
        %1675 = vmatpush1.msra.mxu0 0.0
        %1676 = vmatprep.subr.mxu0 0.0
        %1677 = vmatpush1.msra.mxu0 0.0
        %1678 = vmatprep.subr.mxu0 0.0
        %1679 = vmatpush1.msra.mxu0 0.0
        %1680 = vmatprep.subr.mxu0 0.0
        %1681 = vmatpush1.msra.mxu0 0.0
        %1682 = vmatprep.subr.mxu0 0.0
        %1683 = vmatpush1.msra.mxu0 0.0
        %1684 = vmatprep.subr.mxu0 0.0
        %1685 = vmatpush1.msra.mxu0 0.0
        %1686 = vmatprep.subr.mxu0 0.0
        %1687 = vmatpush1.msra.mxu0 0.0
        %1688 = vmatprep.subr.mxu0 0.0
        %1689 = vmatpush1.msra.mxu0 0.0
        %1690 = vmatprep.subr.mxu0 0.0
        %1691 = vmatpush1.msra.mxu0 0.0
        %1692 = vmatprep.subr.mxu0 0.0
        %1693 = vmatpush1.msra.mxu0 0.0
        %1694 = vmatprep.subr.mxu0 0.0
        %1695 = vmatpush1.msra.mxu0 0.0
        %1696 = vmatprep.subr.mxu0 0.0
        %1697 = vmatpush1.msra.mxu0 0.0
        %1698 = vmatprep.subr.mxu0 0.0
        %1699 = vmatpush1.msra.mxu0 0.0
        %1700 = vmatprep.subr.mxu0 0.0
        %1701 = vmatpush1.msra.mxu0 0.0
        %1702 = vmatprep.subr.mxu0 0.0
        %1703 = vmatpush1.msra.mxu0 0.0
        %1704 = vmatprep.subr.mxu0 0.0
        %1705 = vmatpush1.msra.mxu0 0.0
        %1706 = vmatprep.subr.mxu0 0.0
        %1707 = vmatpush1.msra.mxu0 0.0
        %1708 = vmatprep.subr.mxu0 0.0
        %1709 = vmatpush1.msra.mxu0 0.0
        %1710 = vmatprep.subr.mxu0 0.0
        %1711 = vmatpush1.msra.mxu0 0.0
        %1712 = vmatprep.subr.mxu0 0.0
        %1713 = vmatpush1.msra.mxu0 0.0
        %1714 = vmatprep.subr.mxu0 0.0
        %1715 = vmatpush1.msra.mxu0 0.0
        %1716 = vmatprep.subr.mxu0 0.0
        %1717 = vmatpush1.msra.mxu0 0.0
        %1718 = vmatprep.subr.mxu0 0.0
        %1719 = vmatpush1.msra.mxu0 0.0
        %1720 = vmatprep.subr.mxu0 0.0
        %1721 = vmatpush1.msra.mxu0 0.0
        %1722 = vmatprep.subr.mxu0 0.0
        %1723 = vmatpush1.msra.mxu0 0.0
        %1724 = vmatprep.subr.mxu0 0.0
        %1725 = vmatpush1.msra.mxu0 0.0
        %1726 = vmatprep.subr.mxu0 0.0
        %1727 = vmatpush1.msra.mxu0 0.0
        %1728 = vmatprep.subr.mxu0 0.0
        %1729 = vmatpush1.msra.mxu0 0.0
        %1730 = vmatprep.mubr.f32.mxu0 0.0
        %v1731 = vand.u32 %v267, 4294901760
        %v1732 = vsub.f32 %v267, %v1731
        %v1733 = vand.u32 %v1732, 4294901760
        %v1734 = vsub.f32 %v1732, %v1733
        %v1735 = vand.u32 %v1734, 4294901760
        %1736 = vmatmul.mubr.f32.gmra.mrb[0].mxu0 %v1735
        %v1737 = vpop.f32.mrb[0].mxu0
        %v1738 = vadd.f32 0.0, %v1737
        %v1739 = vpop.f32.mrb[0].mxu0
        %v1740 = vadd.f32 0.0, %v1739
        %1741 = vdwg.mxu0
        %v1742 = vand.u32 %v265, 4294901760
        %v1743 = vsub.f32 %v265, %v1742
        %v1744 = vand.u32 %v1743, 4294901760
        %v1745 = vsub.f32 %v1743, %v1744
        %v1746 = vand.u32 %v1745, 4294901760
        %1747 = vmatprep.subr.mxu0 %v1746
        %v1748 = vand.u32 %v264, 4294901760
        %v1749 = vsub.f32 %v264, %v1748
        %v1750 = vand.u32 %v1749, 4294901760
        %v1751 = vsub.f32 %v1749, %v1750
        %v1752 = vand.u32 %v1751, 4294901760
        %1753 = vmatpush1.msra.mxu0 %v1752
        %1754 = vmatprep.subr.mxu0 0.0
        %1755 = vmatpush1.msra.mxu0 0.0
        %1756 = vmatprep.subr.mxu0 0.0
        %1757 = vmatpush1.msra.mxu0 0.0
        %1758 = vmatprep.subr.mxu0 0.0
        %1759 = vmatpush1.msra.mxu0 0.0
        %1760 = vmatprep.subr.mxu0 0.0
        %1761 = vmatpush1.msra.mxu0 0.0
        %1762 = vmatprep.subr.mxu0 0.0
        %1763 = vmatpush1.msra.mxu0 0.0
        %1764 = vmatprep.subr.mxu0 0.0
        %1765 = vmatpush1.msra.mxu0 0.0
        %1766 = vmatprep.subr.mxu0 0.0
        %1767 = vmatpush1.msra.mxu0 0.0
        %1768 = vmatprep.subr.mxu0 0.0
        %1769 = vmatpush1.msra.mxu0 0.0
        %1770 = vmatprep.subr.mxu0 0.0
        %1771 = vmatpush1.msra.mxu0 0.0
        %1772 = vmatprep.subr.mxu0 0.0
        %1773 = vmatpush1.msra.mxu0 0.0
        %1774 = vmatprep.subr.mxu0 0.0
        %1775 = vmatpush1.msra.mxu0 0.0
        %1776 = vmatprep.subr.mxu0 0.0
        %1777 = vmatpush1.msra.mxu0 0.0
        %1778 = vmatprep.subr.mxu0 0.0
        %1779 = vmatpush1.msra.mxu0 0.0
        %1780 = vmatprep.subr.mxu0 0.0
        %1781 = vmatpush1.msra.mxu0 0.0
        %1782 = vmatprep.subr.mxu0 0.0
        %1783 = vmatpush1.msra.mxu0 0.0
        %1784 = vmatprep.subr.mxu0 0.0
        %1785 = vmatpush1.msra.mxu0 0.0
        %1786 = vmatprep.subr.mxu0 0.0
        %1787 = vmatpush1.msra.mxu0 0.0
        %1788 = vmatprep.subr.mxu0 0.0
        %1789 = vmatpush1.msra.mxu0 0.0
        %1790 = vmatprep.subr.mxu0 0.0
        %1791 = vmatpush1.msra.mxu0 0.0
        %1792 = vmatprep.subr.mxu0 0.0
        %1793 = vmatpush1.msra.mxu0 0.0
        %1794 = vmatprep.subr.mxu0 0.0
        %1795 = vmatpush1.msra.mxu0 0.0
        %1796 = vmatprep.subr.mxu0 0.0
        %1797 = vmatpush1.msra.mxu0 0.0
        %1798 = vmatprep.subr.mxu0 0.0
        %1799 = vmatpush1.msra.mxu0 0.0
        %1800 = vmatprep.subr.mxu0 0.0
        %1801 = vmatpush1.msra.mxu0 0.0
        %1802 = vmatprep.subr.mxu0 0.0
        %1803 = vmatpush1.msra.mxu0 0.0
        %1804 = vmatprep.subr.mxu0 0.0
        %1805 = vmatpush1.msra.mxu0 0.0
        %1806 = vmatprep.subr.mxu0 0.0
        %1807 = vmatpush1.msra.mxu0 0.0
        %1808 = vmatprep.subr.mxu0 0.0
        %1809 = vmatpush1.msra.mxu0 0.0
        %1810 = vmatprep.subr.mxu0 0.0
        %1811 = vmatpush1.msra.mxu0 0.0
        %1812 = vmatprep.subr.mxu0 0.0
        %1813 = vmatpush1.msra.mxu0 0.0
        %1814 = vmatprep.subr.mxu0 0.0
        %1815 = vmatpush1.msra.mxu0 0.0
        %1816 = vmatprep.mubr.f32.mxu0 0.0
        %v1817 = vand.u32 %v267, 4294901760
        %1818 = vmatmul.mubr.f32.gmra.mrb[0].mxu0 %v1817
        %v1819 = vpop.f32.mrb[0].mxu0
        %v1820 = vadd.f32 %v1738, %v1819
        %v1821 = vpop.f32.mrb[0].mxu0
        %v1822 = vadd.f32 %v1740, %v1821
        %1823 = vdwg.mxu0
        %v1824 = vand.u32 %v265, 4294901760
        %v1825 = vsub.f32 %v265, %v1824
        %1826 = vmatprep.subr.mxu0 %v1825
        %v1827 = vand.u32 %v264, 4294901760
        %v1828 = vsub.f32 %v264, %v1827
        %1829 = vmatpush1.msra.mxu0 %v1828
        %1830 = vmatprep.subr.mxu0 0.0
        %1831 = vmatpush1.msra.mxu0 0.0
        %1832 = vmatprep.subr.mxu0 0.0
        %1833 = vmatpush1.msra.mxu0 0.0
        %1834 = vmatprep.subr.mxu0 0.0
        %1835 = vmatpush1.msra.mxu0 0.0
        %1836 = vmatprep.subr.mxu0 0.0
        %1837 = vmatpush1.msra.mxu0 0.0
        %1838 = vmatprep.subr.mxu0 0.0
        %1839 = vmatpush1.msra.mxu0 0.0
        %1840 = vmatprep.subr.mxu0 0.0
        %1841 = vmatpush1.msra.mxu0 0.0
        %1842 = vmatprep.subr.mxu0 0.0
        %1843 = vmatpush1.msra.mxu0 0.0
        %1844 = vmatprep.subr.mxu0 0.0
        %1845 = vmatpush1.msra.mxu0 0.0
        %1846 = vmatprep.subr.mxu0 0.0
        %1847 = vmatpush1.msra.mxu0 0.0
        %1848 = vmatprep.subr.mxu0 0.0
        %1849 = vmatpush1.msra.mxu0 0.0
        %1850 = vmatprep.subr.mxu0 0.0
        %1851 = vmatpush1.msra.mxu0 0.0
        %1852 = vmatprep.subr.mxu0 0.0
        %1853 = vmatpush1.msra.mxu0 0.0
        %1854 = vmatprep.subr.mxu0 0.0
        %1855 = vmatpush1.msra.mxu0 0.0
        %1856 = vmatprep.subr.mxu0 0.0
        %1857 = vmatpush1.msra.mxu0 0.0
        %1858 = vmatprep.subr.mxu0 0.0
        %1859 = vmatpush1.msra.mxu0 0.0
        %1860 = vmatprep.subr.mxu0 0.0
        %1861 = vmatpush1.msra.mxu0 0.0
        %1862 = vmatprep.subr.mxu0 0.0
        %1863 = vmatpush1.msra.mxu0 0.0
        %1864 = vmatprep.subr.mxu0 0.0
        %1865 = vmatpush1.msra.mxu0 0.0
        %1866 = vmatprep.subr.mxu0 0.0
        %1867 = vmatpush1.msra.mxu0 0.0
        %1868 = vmatprep.subr.mxu0 0.0
        %1869 = vmatpush1.msra.mxu0 0.0
        %1870 = vmatprep.subr.mxu0 0.0
        %1871 = vmatpush1.msra.mxu0 0.0
        %1872 = vmatprep.subr.mxu0 0.0
        %1873 = vmatpush1.msra.mxu0 0.0
        %1874 = vmatprep.subr.mxu0 0.0
        %1875 = vmatpush1.msra.mxu0 0.0
        %1876 = vmatprep.subr.mxu0 0.0
        %1877 = vmatpush1.msra.mxu0 0.0
        %1878 = vmatprep.subr.mxu0 0.0
        %1879 = vmatpush1.msra.mxu0 0.0
        %1880 = vmatprep.subr.mxu0 0.0
        %1881 = vmatpush1.msra.mxu0 0.0
        %1882 = vmatprep.subr.mxu0 0.0
        %1883 = vmatpush1.msra.mxu0 0.0
        %1884 = vmatprep.subr.mxu0 0.0
        %1885 = vmatpush1.msra.mxu0 0.0
        %1886 = vmatprep.subr.mxu0 0.0
        %1887 = vmatpush1.msra.mxu0 0.0
        %1888 = vmatprep.subr.mxu0 0.0
        %1889 = vmatpush1.msra.mxu0 0.0
        %1890 = vmatprep.subr.mxu0 0.0
        %1891 = vmatpush1.msra.mxu0 0.0
        %1892 = vmatprep.mubr.f32.mxu0 0.0
        %v1893 = vand.u32 %v267, 4294901760
        %v1894 = vsub.f32 %v267, %v1893
        %1895 = vmatmul.mubr.f32.gmra.mrb[0].mxu0 %v1894
        %v1896 = vpop.f32.mrb[0].mxu0
        %v1897 = vadd.f32 %v1820, %v1896
        %v1898 = vpop.f32.mrb[0].mxu0
        %v1899 = vadd.f32 %v1822, %v1898
        %1900 = vdwg.mxu0
        %v1901 = vand.u32 %v265, 4294901760
        %1902 = vmatprep.subr.mxu0 %v1901
        %v1903 = vand.u32 %v264, 4294901760
        %1904 = vmatpush1.msra.mxu0 %v1903
        %1905 = vmatprep.subr.mxu0 0.0
        %1906 = vmatpush1.msra.mxu0 0.0
        %1907 = vmatprep.subr.mxu0 0.0
        %1908 = vmatpush1.msra.mxu0 0.0
        %1909 = vmatprep.subr.mxu0 0.0
        %1910 = vmatpush1.msra.mxu0 0.0
        %1911 = vmatprep.subr.mxu0 0.0
        %1912 = vmatpush1.msra.mxu0 0.0
        %1913 = vmatprep.subr.mxu0 0.0
        %1914 = vmatpush1.msra.mxu0 0.0
        %1915 = vmatprep.subr.mxu0 0.0
        %1916 = vmatpush1.msra.mxu0 0.0
        %1917 = vmatprep.subr.mxu0 0.0
        %1918 = vmatpush1.msra.mxu0 0.0
        %1919 = vmatprep.subr.mxu0 0.0
        %1920 = vmatpush1.msra.mxu0 0.0
        %1921 = vmatprep.subr.mxu0 0.0
        %1922 = vmatpush1.msra.mxu0 0.0
        %1923 = vmatprep.subr.mxu0 0.0
        %1924 = vmatpush1.msra.mxu0 0.0
        %1925 = vmatprep.subr.mxu0 0.0
        %1926 = vmatpush1.msra.mxu0 0.0
        %1927 = vmatprep.subr.mxu0 0.0
        %1928 = vmatpush1.msra.mxu0 0.0
        %1929 = vmatprep.subr.mxu0 0.0
        %1930 = vmatpush1.msra.mxu0 0.0
        %1931 = vmatprep.subr.mxu0 0.0
        %1932 = vmatpush1.msra.mxu0 0.0
        %1933 = vmatprep.subr.mxu0 0.0
        %1934 = vmatpush1.msra.mxu0 0.0
        %1935 = vmatprep.subr.mxu0 0.0
        %1936 = vmatpush1.msra.mxu0 0.0
        %1937 = vmatprep.subr.mxu0 0.0
        %1938 = vmatpush1.msra.mxu0 0.0
        %1939 = vmatprep.subr.mxu0 0.0
        %1940 = vmatpush1.msra.mxu0 0.0
        %1941 = vmatprep.subr.mxu0 0.0
        %1942 = vmatpush1.msra.mxu0 0.0
        %1943 = vmatprep.subr.mxu0 0.0
        %1944 = vmatpush1.msra.mxu0 0.0
        %1945 = vmatprep.subr.mxu0 0.0
        %1946 = vmatpush1.msra.mxu0 0.0
        %1947 = vmatprep.subr.mxu0 0.0
        %1948 = vmatpush1.msra.mxu0 0.0
        %1949 = vmatprep.subr.mxu0 0.0
        %1950 = vmatpush1.msra.mxu0 0.0
        %1951 = vmatprep.subr.mxu0 0.0
        %1952 = vmatpush1.msra.mxu0 0.0
        %1953 = vmatprep.subr.mxu0 0.0
        %1954 = vmatpush1.msra.mxu0 0.0
        %1955 = vmatprep.subr.mxu0 0.0
        %1956 = vmatpush1.msra.mxu0 0.0
        %1957 = vmatprep.subr.mxu0 0.0
        %1958 = vmatpush1.msra.mxu0 0.0
        %1959 = vmatprep.subr.mxu0 0.0
        %1960 = vmatpush1.msra.mxu0 0.0
        %1961 = vmatprep.subr.mxu0 0.0
        %1962 = vmatpush1.msra.mxu0 0.0
        %1963 = vmatprep.subr.mxu0 0.0
        %1964 = vmatpush1.msra.mxu0 0.0
        %1965 = vmatprep.subr.mxu0 0.0
        %1966 = vmatpush1.msra.mxu0 0.0
        %1967 = vmatprep.mubr.f32.mxu0 0.0
        %v1968 = vand.u32 %v267, 4294901760
        %v1969 = vsub.f32 %v267, %v1968
        %v1970 = vand.u32 %v1969, 4294901760
        %1971 = vmatmul.mubr.f32.gmra.mrb[0].mxu0 %v1970
        %v1972 = vpop.f32.mrb[0].mxu0
        %v1973 = vadd.f32 %v1897, %v1972
        %v1974 = vpop.f32.mrb[0].mxu0
        %v1975 = vadd.f32 %v1899, %v1974
        %1976 = vdwg.mxu0
        %v1977 = vand.u32 %v265, 4294901760
        %v1978 = vsub.f32 %v265, %v1977
        %v1979 = vand.u32 %v1978, 4294901760
        %1980 = vmatprep.subr.mxu0 %v1979
        %v1981 = vand.u32 %v264, 4294901760
        %v1982 = vsub.f32 %v264, %v1981
        %v1983 = vand.u32 %v1982, 4294901760
        %1984 = vmatpush1.msra.mxu0 %v1983
        %1985 = vmatprep.subr.mxu0 0.0
        %1986 = vmatpush1.msra.mxu0 0.0
        %1987 = vmatprep.subr.mxu0 0.0
        %1988 = vmatpush1.msra.mxu0 0.0
        %1989 = vmatprep.subr.mxu0 0.0
        %1990 = vmatpush1.msra.mxu0 0.0
        %1991 = vmatprep.subr.mxu0 0.0
        %1992 = vmatpush1.msra.mxu0 0.0
        %1993 = vmatprep.subr.mxu0 0.0
        %1994 = vmatpush1.msra.mxu0 0.0
        %1995 = vmatprep.subr.mxu0 0.0
        %1996 = vmatpush1.msra.mxu0 0.0
        %1997 = vmatprep.subr.mxu0 0.0
        %1998 = vmatpush1.msra.mxu0 0.0
        %1999 = vmatprep.subr.mxu0 0.0
        %2000 = vmatpush1.msra.mxu0 0.0
        %2001 = vmatprep.subr.mxu0 0.0
        %2002 = vmatpush1.msra.mxu0 0.0
        %2003 = vmatprep.subr.mxu0 0.0
        %2004 = vmatpush1.msra.mxu0 0.0
        %2005 = vmatprep.subr.mxu0 0.0
        %2006 = vmatpush1.msra.mxu0 0.0
        %2007 = vmatprep.subr.mxu0 0.0
        %2008 = vmatpush1.msra.mxu0 0.0
        %2009 = vmatprep.subr.mxu0 0.0
        %2010 = vmatpush1.msra.mxu0 0.0
        %2011 = vmatprep.subr.mxu0 0.0
        %2012 = vmatpush1.msra.mxu0 0.0
        %2013 = vmatprep.subr.mxu0 0.0
        %2014 = vmatpush1.msra.mxu0 0.0
        %2015 = vmatprep.subr.mxu0 0.0
        %2016 = vmatpush1.msra.mxu0 0.0
        %2017 = vmatprep.subr.mxu0 0.0
        %2018 = vmatpush1.msra.mxu0 0.0
        %2019 = vmatprep.subr.mxu0 0.0
        %2020 = vmatpush1.msra.mxu0 0.0
        %2021 = vmatprep.subr.mxu0 0.0
        %2022 = vmatpush1.msra.mxu0 0.0
        %2023 = vmatprep.subr.mxu0 0.0
        %2024 = vmatpush1.msra.mxu0 0.0
        %2025 = vmatprep.subr.mxu0 0.0
        %2026 = vmatpush1.msra.mxu0 0.0
        %2027 = vmatprep.subr.mxu0 0.0
        %2028 = vmatpush1.msra.mxu0 0.0
        %2029 = vmatprep.subr.mxu0 0.0
        %2030 = vmatpush1.msra.mxu0 0.0
        %2031 = vmatprep.subr.mxu0 0.0
        %2032 = vmatpush1.msra.mxu0 0.0
        %2033 = vmatprep.subr.mxu0 0.0
        %2034 = vmatpush1.msra.mxu0 0.0
        %2035 = vmatprep.subr.mxu0 0.0
        %2036 = vmatpush1.msra.mxu0 0.0
        %2037 = vmatprep.subr.mxu0 0.0
        %2038 = vmatpush1.msra.mxu0 0.0
        %2039 = vmatprep.subr.mxu0 0.0
        %2040 = vmatpush1.msra.mxu0 0.0
        %2041 = vmatprep.subr.mxu0 0.0
        %2042 = vmatpush1.msra.mxu0 0.0
        %2043 = vmatprep.subr.mxu0 0.0
        %2044 = vmatpush1.msra.mxu0 0.0
        %2045 = vmatprep.subr.mxu0 0.0
        %2046 = vmatpush1.msra.mxu0 0.0
        %2047 = vmatprep.mubr.f32.mxu0 0.0
        %v2048 = vand.u32 %v267, 4294901760
        %2049 = vmatmul.mubr.f32.gmra.mrb[0].mxu0 %v2048
        %v2050 = vpop.f32.mrb[0].mxu0
        %v2051 = vadd.f32 %v1973, %v2050
        %v2052 = vpop.f32.mrb[0].mxu0
        %v2053 = vadd.f32 %v1975, %v2052
        %2054 = vdwg.mxu0
        %v2055 = vand.u32 %v265, 4294901760
        %2056 = vmatprep.subr.mxu0 %v2055
        %v2057 = vand.u32 %v264, 4294901760
        %2058 = vmatpush1.msra.mxu0 %v2057
        %2059 = vmatprep.subr.mxu0 0.0
        %2060 = vmatpush1.msra.mxu0 0.0
        %2061 = vmatprep.subr.mxu0 0.0
        %2062 = vmatpush1.msra.mxu0 0.0
        %2063 = vmatprep.subr.mxu0 0.0
        %2064 = vmatpush1.msra.mxu0 0.0
        %2065 = vmatprep.subr.mxu0 0.0
        %2066 = vmatpush1.msra.mxu0 0.0
        %2067 = vmatprep.subr.mxu0 0.0
        %2068 = vmatpush1.msra.mxu0 0.0
        %2069 = vmatprep.subr.mxu0 0.0
        %2070 = vmatpush1.msra.mxu0 0.0
        %2071 = vmatprep.subr.mxu0 0.0
        %2072 = vmatpush1.msra.mxu0 0.0
        %2073 = vmatprep.subr.mxu0 0.0
        %2074 = vmatpush1.msra.mxu0 0.0
        %2075 = vmatprep.subr.mxu0 0.0
        %2076 = vmatpush1.msra.mxu0 0.0
        %2077 = vmatprep.subr.mxu0 0.0
        %2078 = vmatpush1.msra.mxu0 0.0
        %2079 = vmatprep.subr.mxu0 0.0
        %2080 = vmatpush1.msra.mxu0 0.0
        %2081 = vmatprep.subr.mxu0 0.0
        %2082 = vmatpush1.msra.mxu0 0.0
        %2083 = vmatprep.subr.mxu0 0.0
        %2084 = vmatpush1.msra.mxu0 0.0
        %2085 = vmatprep.subr.mxu0 0.0
        %2086 = vmatpush1.msra.mxu0 0.0
        %2087 = vmatprep.subr.mxu0 0.0
        %2088 = vmatpush1.msra.mxu0 0.0
        %2089 = vmatprep.subr.mxu0 0.0
        %2090 = vmatpush1.msra.mxu0 0.0
        %2091 = vmatprep.subr.mxu0 0.0
        %2092 = vmatpush1.msra.mxu0 0.0
        %2093 = vmatprep.subr.mxu0 0.0
        %2094 = vmatpush1.msra.mxu0 0.0
        %2095 = vmatprep.subr.mxu0 0.0
        %2096 = vmatpush1.msra.mxu0 0.0
        %2097 = vmatprep.subr.mxu0 0.0
        %2098 = vmatpush1.msra.mxu0 0.0
        %2099 = vmatprep.subr.mxu0 0.0
        %2100 = vmatpush1.msra.mxu0 0.0
        %2101 = vmatprep.subr.mxu0 0.0
        %2102 = vmatpush1.msra.mxu0 0.0
        %2103 = vmatprep.subr.mxu0 0.0
        %2104 = vmatpush1.msra.mxu0 0.0
        %2105 = vmatprep.subr.mxu0 0.0
        %2106 = vmatpush1.msra.mxu0 0.0
        %2107 = vmatprep.subr.mxu0 0.0
        %2108 = vmatpush1.msra.mxu0 0.0
        %2109 = vmatprep.subr.mxu0 0.0
        %2110 = vmatpush1.msra.mxu0 0.0
        %2111 = vmatprep.subr.mxu0 0.0
        %2112 = vmatpush1.msra.mxu0 0.0
        %2113 = vmatprep.subr.mxu0 0.0
        %2114 = vmatpush1.msra.mxu0 0.0
        %2115 = vmatprep.subr.mxu0 0.0
        %2116 = vmatpush1.msra.mxu0 0.0
        %2117 = vmatprep.subr.mxu0 0.0
        %2118 = vmatpush1.msra.mxu0 0.0
        %2119 = vmatprep.subr.mxu0 0.0
        %2120 = vmatpush1.msra.mxu0 0.0
        %2121 = vmatprep.mubr.f32.mxu0 0.0
        %v2122 = vand.u32 %v267, 4294901760
        %2123 = vmatmul.mubr.f32.gmra.mrb[0].mxu0 %v2122
        %v2124 = vpop.f32.mrb[0].mxu0
        %v2125 = vadd.f32 %v2051, %v2124
        %v2126 = vpop.f32.mrb[0].mxu0
        %v2127 = vadd.f32 %v2053, %v2126
        %2128 = vdwg.mxu0
        %2129 = vst [vmem:[%s241] sm:$0xff] %v730
        %2130 = vst [vmem:[%s241 + $0x8] sm:$0xff] %v732
        %2131 = vst [vmem:[%s241 + $0x10] sm:$0xff] %v1195
        %2132 = vst [vmem:[%s241 + $0x18] sm:$0xff] %v1197
        %2133 = vst [vmem:[%s241 + $0x20] sm:$0xff] %v1660
        %2134 = vst [vmem:[%s241 + $0x28] sm:$0xff] %v1662
        %2135 = vst [vmem:[%s241 + $0x30] sm:$0xff] %v2125
        %2136 = vst [vmem:[%s241 + $0x38] sm:$0xff] %v2127
        %v2137 = vld [vmem:[%s3] sm:$0xff]
        %v2138 = vld [vmem:[%s3 + $0x8] sm:$0xff]
        %v2139 = vld [vmem:[%s3 + $0x10] sm:$0xff]
        %v2140 = vld [vmem:[%s3 + $0x18] sm:$0xff]
        %v2141 = vld [vmem:[%s3 + $0x20] sm:$0xff]
        %v2142 = vld [vmem:[%s3 + $0x28] sm:$0xff]
        %v2143 = vld [vmem:[%s3 + $0x30] sm:$0xff]
        %v2144 = vld [vmem:[%s3 + $0x38] sm:$0xff]
        %v2145 = vmul.f32 %v257, %v2137
        %v2146 = vmul.f32 %v257, %v2138
        %v2147 = vmul.f32 %v257, %v2139
        %v2148 = vmul.f32 %v257, %v2140
        %v2149 = vmul.f32 %v257, %v2141
        %v2150 = vmul.f32 %v257, %v2142
        %v2151 = vmul.f32 %v257, %v2143
        %v2152 = vmul.f32 %v257, %v2144
        %v2153 = vld [vmem:[%s208] sm:$0xff]
        %v2154 = vld [vmem:[%s208 + $0x8] sm:$0xff]
        %v2155 = vld [vmem:[%s208 + $0x10] sm:$0xff]
        %v2156 = vld [vmem:[%s208 + $0x18] sm:$0xff]
        %v2157 = vld [vmem:[%s208 + $0x20] sm:$0xff]
        %v2158 = vld [vmem:[%s208 + $0x28] sm:$0xff]
        %v2159 = vld [vmem:[%s208 + $0x30] sm:$0xff]
        %v2160 = vld [vmem:[%s208 + $0x38] sm:$0xff]
        %v2161 = vsub.f32 1.0, %v2145
        %v2162 = vsub.f32 1.0, %v2146
        %v2163 = vsub.f32 1.0, %v2147
        %v2164 = vsub.f32 1.0, %v2148
        %v2165 = vsub.f32 1.0, %v2149
        %v2166 = vsub.f32 1.0, %v2150
        %v2167 = vsub.f32 1.0, %v2151
        %v2168 = vsub.f32 1.0, %v2152
        %v2169 = vmul.f32 %v2153, %v2161
        %v2170 = vmul.f32 %v2154, %v2162
        %v2171 = vmul.f32 %v2155, %v2163
        %v2172 = vmul.f32 %v2156, %v2164
        %v2173 = vmul.f32 %v2157, %v2165
        %v2174 = vmul.f32 %v2158, %v2166
        %v2175 = vmul.f32 %v2159, %v2167
        %v2176 = vmul.f32 %v2160, %v2168
        %v2177 = vld [vmem:[%s241] sm:$0xff]
        %v2178 = vld [vmem:[%s241 + $0x8] sm:$0xff]
        %v2179 = vld [vmem:[%s241 + $0x10] sm:$0xff]
        %v2180 = vld [vmem:[%s241 + $0x18] sm:$0xff]
        %v2181 = vld [vmem:[%s241 + $0x20] sm:$0xff]
        %v2182 = vld [vmem:[%s241 + $0x28] sm:$0xff]
        %v2183 = vld [vmem:[%s241 + $0x30] sm:$0xff]
        %v2184 = vld [vmem:[%s241 + $0x38] sm:$0xff]
        %v2185 = vadd.f32 %v2177, %v2169
        %v2186 = vadd.f32 %v2178, %v2170
        %v2187 = vadd.f32 %v2179, %v2171
        %v2188 = vadd.f32 %v2180, %v2172
        %v2189 = vadd.f32 %v2181, %v2173
        %v2190 = vadd.f32 %v2182, %v2174
        %v2191 = vadd.f32 %v2183, %v2175
        %v2192 = vadd.f32 %v2184, %v2176
        %2193 = vst [vmem:[%s241] sm:$0xff] %v2185
        %2194 = vst [vmem:[%s241 + $0x8] sm:$0xff] %v2186
        %2195 = vst [vmem:[%s241 + $0x10] sm:$0xff] %v2187
        %2196 = vst [vmem:[%s241 + $0x18] sm:$0xff] %v2188
        %2197 = vst [vmem:[%s241 + $0x20] sm:$0xff] %v2189
        %2198 = vst [vmem:[%s241 + $0x28] sm:$0xff] %v2190
        %2199 = vst [vmem:[%s241 + $0x30] sm:$0xff] %v2191
        %2200 = vst [vmem:[%s241 + $0x38] sm:$0xff] %v2192
        %s2201 = sand.u32 %s128, 1
        %s2202 = scalar_lea.sflag [#allocation4], %s2201
        %s2203 = sand.u32 %s128, 1
        %s2204 = smul.addr %s2203, 64
        %s2205 = scalar_lea.vmem [#allocation5], %s2204
        // Predicated region
        $region41: #{tpu_custom_call.1} parent=35 // pred_check
          %p2206 = pneg %p138
        $region42: #{tpu_custom_call.1} parent=35 // pred_check_branch
          %2208 = sbr.rel (%p2206) target = $region44
        $region43: #{tpu_custom_call.1} parent=35 // pred_region
          %s2210 = ssub.s32 1024, 1024
          %2211 = vsyncadd %s2202, %s2210
          %s2212 = smul.addr %s21, 8
          %s2213 = smul.addr %s2212, 128
          %s2214 = scalar_lea.hbm %s4, %s2213
          %s2216 = sshll.u32 %s2205, 4
          %s2217 = int_to_ptr.vmem [resolvable:$true] %s2216
          %2219 = dma.vmem_to_hbm [thread:$0]  %s2217, 1024, %s2214, %s2202
        $region44: #{tpu_custom_call.1} parent=35 // pred_fallthru
          _
      $region36: #{tpu_custom_call.1} parent=5 // pred_fallthru
        _
      %p2220 = scmp.le.s32.totalorder 2, %s16
      // Predicated region
      $region45: #{tpu_custom_call.1} parent=5 // pred_check
        %p2221 = pneg %p2220
      $region46: #{tpu_custom_call.1} parent=5 // pred_check_branch
        %2223 = sbr.rel (%p2221) target = $region48
      $region47: #{tpu_custom_call.1} parent=5 // pred_region
        %s2224 = ssub.s32 %s16, 2
        // Predicated region
        $region49: #{tpu_custom_call.1} parent=47 // pred_check
          %p2225 = pneg %p144
        $region50: #{tpu_custom_call.1} parent=47 // pred_check_branch
          %2227 = sbr.rel (%p2225) target = $region52
        $region51: #{tpu_custom_call.1} parent=47 // pred_region
          %s2228 = sand.u32 %s129, 1
          %s2229 = scalar_lea.sflag [#allocation4], %s2228
          %s2230 = sand.u32 %s129, 1
          %s2231 = smul.addr %s2230, 64
          %s2232 = scalar_lea.vmem [#allocation5], %s2231
          %2233 = dma.done %s2229, 1024
        $region52: #{tpu_custom_call.1} parent=47 // pred_fallthru
          _
      $region48: #{tpu_custom_call.1} parent=5 // pred_fallthru
        _
    $region6: #{tpu_custom_call.1} parent=1 // loop_footer
      %s20 = sadd.s32 1, %s16
    $region7: #{tpu_custom_call.1} parent=1 // loop_footer_branch
      %15 = sbr.rel target = $region3
    $region8: #{tpu_custom_call.1} parent=1 // loop_exit
      _
    %2234 = vsyncpa [#allocation3], 1
    %s2235 = scalar_lea.sflag [#allocation3], 1
    %2236 = vsyncpa %s2235, 1
    %2237 = vsyncpa [#allocation4], 1
    %s2238 = scalar_lea.sflag [#allocation4], 1
    %2239 = vsyncpa %s2238, 1

</llo_original>
